<compile_context>
chip_gen: v7x
topology: tpu7x:2x2x1
jax: 0.10.0
libtpu: 0.0.40
codegen_flags: <defaults>
</compile_context>

<pallas_src>
import functools
import math

import jax
import jax.numpy as jnp
from jax import lax
from jax.experimental import pallas as pl
from jax.experimental.pallas import tpu as pltpu


def _fit_tile(size, target):
    """Largest tile <= target that divides `size` and is a multiple of 8 (size is pre-padded)."""
    t = min(size, target)
    if size % t == 0 and (t % 8 == 0 or t == size):
        return t
    for c in range(t - (t % 8), 7, -8):
        if size % c == 0:
            return c
    return size


def _vmem_limit_bytes():
    """Per-generation scoped-VMEM budget with headroom for compiler-internal scratch.

    v7x: 64 MiB physical -> ~56 MiB; v5e/v6e: 128 MiB physical -> 100 MiB.
    """
    try:
        cap = int(pltpu.get_tpu_info().vmem_capacity_bytes)
    except Exception:
        cap = 128 * 1024 * 1024
    return max(32 * 1024 * 1024, min(cap - 8 * 1024 * 1024, 100 * 1024 * 1024))


def _weight_spec(shape, single_buffer):
    """BlockSpec for a constant-index weight slab (fetched once for the whole grid)."""
    index_map = lambda *_: (0,) * len(shape)
    if single_buffer:
        # Constant blocks don't need double buffering; halving their VMEM footprint is mandatory
        # headroom on v7x (64 MiB VMEM) at realistic d_model.
        return pl.BlockSpec(shape, index_map, pipeline_mode=pl.Buffered(1))
    return pl.BlockSpec(shape, index_map)


# --------------------- Kernel A: fused QKV projection + RoPE ---------------------
def _qkv_rope_kernel(x_ref, wqkv_t_ref, cs_ref, q_ref, k_ref, v_ref, *, n_heads, head_dim):
    f32 = jnp.float32
    hd, hd2 = head_dim, head_dim // 2
    x = x_ref[0]                      # (ts, D)   bf16
    w = wqkv_t_ref[...]               # (D, 3D)   bf16; q/k columns pre-permuted per-head half-split
    cs = cs_ref[0]                    # (ts, hd)  f32; [cos | sin] packed lane-dense
    cos, sin = cs[:, :hd2], cs[:, hd2:]
    D = x.shape[-1]

    # One fused projection on the MXU, f32 accumulation.
    # TODO(synk): for d_model where the (D, 3D) bf16 slab exceeds ~1/3 of VMEM (D >= ~2300), add a
    # K grid axis ("arbitrary"), stream wqkv_t in (tk, 3D) blocks and accumulate qkv in a
    # (ts, 3D) f32 VMEM scratch, applying RoPE + stores on the last K step.
    qkv = jnp.dot(x, w, preferred_element_type=f32)        # (ts, 3D) f32

    def rope(t):
        # Per-head half-split layout: head h occupies cols [h*hd, (h+1)*hd); its first hd/2 cols
        # hold the first-of-pair (even) features, its last hd/2 the second-of-pair (odd) ones.
        parts = []
        for h in range(n_heads):
            e = t[:, h * hd:h * hd + hd2]
            o = t[:, h * hd + hd2:(h + 1) * hd]
            parts.append(e * cos - o * sin)
            parts.append(e * sin + o * cos)
        return jnp.concatenate(parts, axis=-1)

    q_ref[0] = rope(qkv[:, :D]).astype(q_ref.dtype)
    k_ref[0] = rope(qkv[:, D:2 * D]).astype(k_ref.dtype)
    v_ref[0] = qkv[:, 2 * D:].astype(v_ref.dtype)          # V keeps the original head layout.


# --------------- Kernel B: flash attention (online softmax) + output projection ---------------
def _flash_attn_out_kernel(q_ref, k_ref, v_ref, wo_t_ref, o_ref, m_sc, l_sc, acc_sc, *,
                           n_heads, head_dim, tq, tkv):
    f32 = jnp.float32
    i = pl.program_id(1)   # query tile
    j = pl.program_id(2)   # kv tile (innermost, "arbitrary")
    hd = head_dim

    @pl.when(j == 0)
    def _init():
        m_sc[...] = jnp.full(m_sc.shape, -jnp.inf, f32)
        l_sc[...] = jnp.zeros_like(l_sc)
        acc_sc[...] = jnp.zeros_like(acc_sc)

    q_lo = i * tq
    q_hi = i * tq + (tq - 1)
    k_lo = j * tkv
    k_hi = j * tkv + (tkv - 1)

    def process(masked):
        q = q_ref[0]       # (tq, D)  bf16, RoPE'd + pre-scaled by 1/sqrt(hd), per-head half-split
        k = k_ref[0]       # (tkv, D) bf16, RoPE'd, per-head half-split
        v = v_ref[0]       # (tkv, D) bf16, original head-contiguous layout
        if masked:
            q_pos = q_lo + lax.broadcasted_iota(jnp.int32, (tq, tkv), 0)
            k_pos = k_lo + lax.broadcasted_iota(jnp.int32, (tq, tkv), 1)
            bias = jnp.where(k_pos > q_pos, f32(-1e9), f32(0.0))   # torch.triu(..., diagonal=1)
        dn = (((1,), (1,)), ((), ()))   # contract last dims of both operands (no kh.T relayout)
        # TODO(synk): for n_heads >= 16, convert this unrolled loop to lax.fori_loop with
        # pl.ds(h*hd, hd) ref slices to bound code size / vreg live ranges.
        for h in range(n_heads):
            sl = slice(h * hd, (h + 1) * hd)
            # Single full-width K=head_dim contraction per head (scale already folded into wq).
            s = lax.dot_general(q[:, sl], k[:, sl], dimension_numbers=dn,
                                preferred_element_type=f32)          # (tq, tkv) f32
            if masked:
                s = s + bias

            m_prev = m_sc[h]                                            # (tq, 1)
            m_new = jnp.maximum(m_prev, jnp.max(s, axis=-1, keepdims=True))
            alpha = jnp.exp(m_prev - m_new)
            p = jnp.exp(s - m_new)                                      # (tq, tkv) f32
            l_sc[h] = alpha * l_sc[h] + jnp.sum(p, axis=-1, keepdims=True)
            acc_sc[h] = alpha * acc_sc[h] + jnp.dot(p.astype(v.dtype), v[:, sl],
                                                    preferred_element_type=f32)
            m_sc[h] = m_new

    # Tiles straddling the causal diagonal need the mask; strictly-past tiles skip mask
    # construction entirely; fully-future tiles are skipped (their K/V DMA is also elided by the
    # clamped index_map in the wrapper).
    @pl.when(jnp.logical_and(k_lo <= q_hi, k_hi > q_lo))
    def _diagonal():
        process(masked=True)

    @pl.when(k_hi <= q_lo)
    def _strictly_past():
        process(masked=False)

    @pl.when(j == pl.num_programs(2) - 1)
    def _finalize():
        # TODO(synk): lane-pad m/l scratch to 128 lanes (stock flash MIN_BLOCK_SIZE convention) to
        # avoid lane-sparse broadcasts at large tq / head_dim.
        o_parts = [(acc_sc[h] * pl.reciprocal(l_sc[h], approx=True)).astype(wo_t_ref.dtype)
                   for h in range(n_heads)]
        o_full = jnp.concatenate(o_parts, axis=-1)            # (tq, D) bf16, lane-dense
        o_ref[0] = jnp.dot(o_full, wo_t_ref[...],
                           preferred_element_type=f32).astype(o_ref.dtype)   # single K=D matmul


# ----------------------------------- wrapper -----------------------------------
def _forward(x_bf, wqkv_t, wo_t, cs, *, n_heads, head_dim, ts, tq, tkv, out_dtype,
             single_buffer_weights):
    B, Sp, D = x_bf.shape
    vmem = _vmem_limit_bytes()

    # ---- kernel A: fused QKV projection + RoPE ----
    q_r, k_r, v_r = pl.pallas_call(
        functools.partial(_qkv_rope_kernel, n_heads=n_heads, head_dim=head_dim),
        out_shape=(jax.ShapeDtypeStruct((B, Sp, D), jnp.bfloat16),) * 3,
        grid_spec=pltpu.PrefetchScalarGridSpec(
            num_scalar_prefetch=0,
            grid=(B, Sp // ts),
            in_specs=[
                pl.BlockSpec((1, ts, D), lambda b, s: (b, s, 0)),
                _weight_spec((D, 3 * D), single_buffer_weights),
                pl.BlockSpec((1, ts, head_dim), lambda b, s: (b, s, 0)),
            ],
            out_specs=[pl.BlockSpec((1, ts, D), lambda b, s: (b, s, 0))] * 3,
        ),
        compiler_params=pltpu.CompilerParams(
            dimension_semantics=("parallel", "parallel"),
            vmem_limit_bytes=vmem),
    )(x_bf, wqkv_t, cs)

    # Last kv block with any causally visible position for query tile i.
    last_kv = lambda i: (i * tq + (tq - 1)) // tkv

    # ---- kernel B: flash attention + fused output projection ----
    out = pl.pallas_call(
        functools.partial(_flash_attn_out_kernel, n_heads=n_heads, head_dim=head_dim,
                          tq=tq, tkv=tkv),
        out_shape=jax.ShapeDtypeStruct((B, Sp, D), out_dtype),
        grid_spec=pltpu.PrefetchScalarGridSpec(
            num_scalar_prefetch=0,
            grid=(B, Sp // tq, Sp // tkv),
            in_specs=[
                pl.BlockSpec((1, tq, D), lambda b, i, j: (b, i, 0)),
                # Clamp the kv block index: fully-masked (future) tiles map to the last needed
                # block, so consecutive equal indices elide their HBM->VMEM DMA.
                pl.BlockSpec((1, tkv, D), lambda b, i, j: (b, jnp.minimum(j, last_kv(i)), 0)),
                pl.BlockSpec((1, tkv, D), lambda b, i, j: (b, jnp.minimum(j, last_kv(i)), 0)),
                _weight_spec((D, D), single_buffer_weights),
            ],
            out_specs=pl.BlockSpec((1, tq, D), lambda b, i, j: (b, i, 0)),
            scratch_shapes=[
                pltpu.VMEM((n_heads, tq, 1), jnp.float32),          # running max
                pltpu.VMEM((n_heads, tq, 1), jnp.float32),          # running sum
                pltpu.VMEM((n_heads, tq, head_dim), jnp.float32),   # unnormalized attention out
            ],
        ),
        compiler_params=pltpu.CompilerParams(
            dimension_semantics=("parallel", "parallel", "arbitrary"),
            vmem_limit_bytes=vmem),
    )(q_r, k_r, v_r, wo_t)
    return out


def causal_mha_with_rope(x, wq, wk, wv, wo, token_positions, *, n_heads, theta,
                         proj_tile=256, q_tile=256, kv_tile=512):
    """x: (B, S, D) f32; wq/wk/wv/wo: (D, D) f32 (PyTorch out-features-first); positions: (B, S)."""
    B, S, D = x.shape
    hd = D // n_heads
    hd2 = hd // 2
    bf16, f32 = jnp.bfloat16, jnp.float32

    # Pad S to a multiple of 8 so tiles always satisfy the (8, 128) block constraint.  Padded keys
    # sit at positions >= S and are removed by the causal mask; padded query rows are sliced off.
    Sp = -(-S // 8) * 8
    if Sp != S:
        x = jnp.pad(x, ((0, 0), (0, Sp - S), (0, 0)))
        token_positions = jnp.pad(token_positions, ((0, 0), (0, Sp - S)))

    # TODO(synk): on v7x (2 TCs/chip) shrink q_tile (or split heads into a parallel axis) if
    # B * Sp/tq < 2 so both TensorCores get work.
    ts = _fit_tile(Sp, proj_tile)
    tq = _fit_tile(Sp, q_tile)
    tkv = _fit_tile(Sp, kv_tile)

    # RoPE tables, packed lane-dense as [cos | sin]: (B, Sp, hd).
    inv_freq = 1.0 / (theta ** (jnp.arange(0, hd, 2, dtype=f32) / hd))
    ang = token_positions[..., None].astype(f32) * inv_freq
    cs = jnp.concatenate([jnp.cos(ang), jnp.sin(ang)], axis=-1)

    # Permute Q/K output features into the per-head half-split layout: within head h's hd columns,
    # the first hd/2 hold the first-of-pair (even) features, the last hd/2 the second-of-pair.
    # Scores are invariant to this consistent q/k permutation; RoPE becomes plain half-block VPU
    # math and Kernel B issues one contiguous K=head_dim contraction per head.
    c = jnp.arange(D)
    h_idx, r = c // hd, c % hd
    perm = jnp.where(r < hd2, h_idx * hd + 2 * r, h_idx * hd + 2 * (r - hd2) + 1)

    # Fold the 1/sqrt(head_dim) softmax scale into wq (before the bf16 cast).
    scale = 1.0 / math.sqrt(hd)
    wqkv_t = jnp.concatenate([(wq * scale).T[:, perm], wk.T[:, perm], wv.T], axis=1).astype(bf16)
    wo_t = wo.T.astype(bf16)
    x_bf = x.astype(bf16)

    kwargs = dict(n_heads=n_heads, head_dim=hd, ts=ts, tq=tq, tkv=tkv, out_dtype=x.dtype)
    try:
        out = _forward(x_bf, wqkv_t, wo_t, cs, single_buffer_weights=True, **kwargs)
    except Exception:
        # pipeline_mode=pl.Buffered(1) unsupported on this jax/Mosaic version; fall back to the
        # default double-buffered weight blocks (correctness unchanged).
        out = _forward(x_bf, wqkv_t, wo_t, cs, single_buffer_weights=False, **kwargs)
    return out[:, :S] if Sp != S else out


# ----------------------------- pure-JAX reference -----------------------------
def _reference(x, wq, wk, wv, wo, token_positions, *, n_heads, theta):
    B, S, D = x.shape
    hd = D // n_heads
    q = (x @ wq.T).reshape(B, S, n_heads, hd).transpose(0, 2, 1, 3)
    k = (x @ wk.T).reshape(B, S, n_heads, hd).transpose(0, 2, 1, 3)
    v = (x @ wv.T).reshape(B, S, n_heads, hd).transpose(0, 2, 1, 3)

    inv_freq = 1.0 / (theta ** (jnp.arange(0, hd, 2, dtype=jnp.float32) / hd))
    ang = token_positions[..., None].astype(jnp.float32) * inv_freq        # (B, S, hd/2)
    cos = jnp.cos(ang)[:, None]                                            # (B, 1, S, hd/2)
    sin = jnp.sin(ang)[:, None]

    def rope(t):
        t1, t2 = t[..., 0::2], t[..., 1::2]
        return jnp.stack([t1 * cos - t2 * sin, t1 * sin + t2 * cos], axis=-1).reshape(t.shape)

    q, k = rope(q), rope(k)
    scores = q @ jnp.swapaxes(k, -1, -2) / jnp.sqrt(jnp.float32(hd))
    mask = jnp.triu(jnp.ones((S, S), bool), k=1)
    scores = jnp.where(mask[None, None], jnp.float32(-1e9), scores)
    w = jax.nn.softmax(scores, axis=-1)
    out = (w @ v).transpose(0, 2, 1, 3).reshape(B, S, D)
    return out @ wo.T


if __name__ == "__main__":
    B, S, D, H = 2, 8, 32, 4
    THETA = 10000.0

    key = jax.random.PRNGKey(0)
    kx, kq, kk, kv, ko = jax.random.split(key, 5)
    x = jax.random.normal(kx, (B, S, D), jnp.float32)
    wq = jax.random.normal(kq, (D, D), jnp.float32) * 0.1
    wk = jax.random.normal(kk, (D, D), jnp.float32) * 0.1
    wv = jax.random.normal(kv, (D, D), jnp.float32) * 0.1
    wo = jax.random.normal(ko, (D, D), jnp.float32) * 0.1
    token_positions = jnp.tile(jnp.arange(S, dtype=jnp.int32)[None, :], (B, 1))

    out = causal_mha_with_rope(x, wq, wk, wv, wo, token_positions, n_heads=H, theta=THETA)
    out = jax.block_until_ready(out)

    ref = _reference(x, wq, wk, wv, wo, token_positions, n_heads=H, theta=THETA)
    assert out.shape == (B, S, D)
    # MXU operands are bf16 (f32 accumulation), so compare against the f32 reference with a
    # bf16-appropriate tolerance.
    assert jnp.allclose(out, ref, atol=5e-2, rtol=5e-2), "kernel mismatch vs reference"
    print("KERNEL_OK")
</pallas_src>

<mosaic_0001>
module attributes {stable_mosaic.version = 11 : i64} {
  func.func @_qkv_rope_kernel(%arg0: i32, %arg1: i32, %arg2: memref<1x8x32xbf16, #tpu.memory_space<vmem>>, %arg3: memref<32x96xbf16, #tpu.memory_space<vmem>>, %arg4: memref<1x8x8xf32, #tpu.memory_space<vmem>>, %arg5: memref<1x8x32xbf16, #tpu.memory_space<vmem>>, %arg6: memref<1x8x32xbf16, #tpu.memory_space<vmem>>, %arg7: memref<1x8x32xbf16, #tpu.memory_space<vmem>>) attributes {dimension_semantics = [#tpu.dimension_semantics<parallel>, #tpu.dimension_semantics<parallel>], iteration_bounds = array<i64: 2, 1>, scalar_prefetch = 0 : i64, scratch_operands = 0 : i64, tpu.core_type = #tpu.core_type<tc>, window_params = [{transform_indices = @transform_0, window_bounds = array<i64: 1, 8, 32>}, {pipeline_mode = #tpu.pipeline_mode<synchronous>, transform_indices = @transform_1, window_bounds = array<i64: 32, 96>}, {transform_indices = @transform_2, window_bounds = array<i64: 1, 8, 8>}, {transform_indices = @transform_3, window_bounds = array<i64: 1, 8, 32>}, {transform_indices = @transform_4, window_bounds = array<i64: 1, 8, 32>}, {transform_indices = @transform_5, window_bounds = array<i64: 1, 8, 32>}]} {
    %c0 = arith.constant 0 : index
    %c0_0 = arith.constant 0 : index
    %c0_1 = arith.constant 0 : index
    %0 = vector.load %arg2[%c0, %c0_0, %c0_1] : memref<1x8x32xbf16, #tpu.memory_space<vmem>>, vector<1x8x32xbf16>
    %1 = vector.shape_cast %0 : vector<1x8x32xbf16> to vector<8x32xbf16>
    %c0_2 = arith.constant 0 : index
    %c0_3 = arith.constant 0 : index
    %2 = vector.load %arg3[%c0_2, %c0_3] : memref<32x96xbf16, #tpu.memory_space<vmem>>, vector<32x96xbf16>
    %c0_4 = arith.constant 0 : index
    %c0_5 = arith.constant 0 : index
    %c0_6 = arith.constant 0 : index
    %3 = vector.load %arg4[%c0_4, %c0_5, %c0_6] : memref<1x8x8xf32, #tpu.memory_space<vmem>>, vector<1x8x8xf32>
    %4 = vector.shape_cast %3 : vector<1x8x8xf32> to vector<8x8xf32>
    %5 = vector.extract_strided_slice %4 {offsets = [0, 0], sizes = [8, 4], strides = [1, 1]} : vector<8x8xf32> to vector<8x4xf32>
    %6 = vector.extract_strided_slice %4 {offsets = [0, 4], sizes = [8, 4], strides = [1, 1]} : vector<8x8xf32> to vector<8x4xf32>
    %cst = arith.constant dense<0.000000e+00> : vector<8x96xf32>
    %7 = tpu.matmul %1, %2, %cst {dimension_numbers = #tpu.dot_dimension_numbers<[1], [0], [0], [1], [0, 0, 1, 1], [], []>} : vector<8x32xbf16>, vector<32x96xbf16>, vector<8x96xf32> -> vector<8x96xf32>
    %8 = vector.extract_strided_slice %7 {offsets = [0, 0], sizes = [8, 32], strides = [1, 1]} : vector<8x96xf32> to vector<8x32xf32>
    %9 = vector.extract_strided_slice %8 {offsets = [0, 0], sizes = [8, 4], strides = [1, 1]} : vector<8x32xf32> to vector<8x4xf32>
    %10 = vector.extract_strided_slice %8 {offsets = [0, 4], sizes = [8, 4], strides = [1, 1]} : vector<8x32xf32> to vector<8x4xf32>
    %11 = arith.mulf %9, %5 : vector<8x4xf32>
    %12 = arith.mulf %10, %6 : vector<8x4xf32>
    %13 = arith.subf %11, %12 : vector<8x4xf32>
    %14 = arith.mulf %9, %6 : vector<8x4xf32>
    %15 = arith.mulf %10, %5 : vector<8x4xf32>
    %16 = arith.addf %14, %15 : vector<8x4xf32>
    %17 = vector.extract_strided_slice %8 {offsets = [0, 8], sizes = [8, 4], strides = [1, 1]} : vector<8x32xf32> to vector<8x4xf32>
    %18 = vector.extract_strided_slice %8 {offsets = [0, 12], sizes = [8, 4], strides = [1, 1]} : vector<8x32xf32> to vector<8x4xf32>
    %19 = arith.mulf %17, %5 : vector<8x4xf32>
    %20 = arith.mulf %18, %6 : vector<8x4xf32>
    %21 = arith.subf %19, %20 : vector<8x4xf32>
    %22 = arith.mulf %17, %6 : vector<8x4xf32>
    %23 = arith.mulf %18, %5 : vector<8x4xf32>
    %24 = arith.addf %22, %23 : vector<8x4xf32>
    %25 = vector.extract_strided_slice %8 {offsets = [0, 16], sizes = [8, 4], strides = [1, 1]} : vector<8x32xf32> to vector<8x4xf32>
    %26 = vector.extract_strided_slice %8 {offsets = [0, 20], sizes = [8, 4], strides = [1, 1]} : vector<8x32xf32> to vector<8x4xf32>
    %27 = arith.mulf %25, %5 : vector<8x4xf32>
    %28 = arith.mulf %26, %6 : vector<8x4xf32>
    %29 = arith.subf %27, %28 : vector<8x4xf32>
    %30 = arith.mulf %25, %6 : vector<8x4xf32>
    %31 = arith.mulf %26, %5 : vector<8x4xf32>
    %32 = arith.addf %30, %31 : vector<8x4xf32>
    %33 = vector.extract_strided_slice %8 {offsets = [0, 24], sizes = [8, 4], strides = [1, 1]} : vector<8x32xf32> to vector<8x4xf32>
    %34 = vector.extract_strided_slice %8 {offsets = [0, 28], sizes = [8, 4], strides = [1, 1]} : vector<8x32xf32> to vector<8x4xf32>
    %35 = arith.mulf %33, %5 : vector<8x4xf32>
    %36 = arith.mulf %34, %6 : vector<8x4xf32>
    %37 = arith.subf %35, %36 : vector<8x4xf32>
    %38 = arith.mulf %33, %6 : vector<8x4xf32>
    %39 = arith.mulf %34, %5 : vector<8x4xf32>
    %40 = arith.addf %38, %39 : vector<8x4xf32>
    %41 = tpu.concatenate %13, %16, %21, %24, %29, %32, %37, %40 in 1 : vector<8x4xf32>, vector<8x4xf32>, vector<8x4xf32>, vector<8x4xf32>, vector<8x4xf32>, vector<8x4xf32>, vector<8x4xf32>, vector<8x4xf32> -> vector<8x32xf32>
    %42 = arith.truncf %41 : vector<8x32xf32> to vector<8x32xbf16>
    %c0_7 = arith.constant 0 : index
    %c0_8 = arith.constant 0 : index
    %c0_9 = arith.constant 0 : index
    %43 = vector.load %arg5[%c0_7, %c0_8, %c0_9] : memref<1x8x32xbf16, #tpu.memory_space<vmem>>, vector<1x8x32xbf16>
    %44 = vector.shape_cast %43 : vector<1x8x32xbf16> to vector<8x32xbf16>
    %45 = vector.shape_cast %42 : vector<8x32xbf16> to vector<1x8x32xbf16>
    tpu.vector_store %arg5[%c0_7, %c0_8, %c0_9], %45 {strides = array<i32>} : memref<1x8x32xbf16, #tpu.memory_space<vmem>>, vector<1x8x32xbf16>,
    %46 = vector.extract_strided_slice %7 {offsets = [0, 32], sizes = [8, 32], strides = [1, 1]} : vector<8x96xf32> to vector<8x32xf32>
    %47 = vector.extract_strided_slice %46 {offsets = [0, 0], sizes = [8, 4], strides = [1, 1]} : vector<8x32xf32> to vector<8x4xf32>
    %48 = vector.extract_strided_slice %46 {offsets = [0, 4], sizes = [8, 4], strides = [1, 1]} : vector<8x32xf32> to vector<8x4xf32>
    %49 = arith.mulf %47, %5 : vector<8x4xf32>
    %50 = arith.mulf %48, %6 : vector<8x4xf32>
    %51 = arith.subf %49, %50 : vector<8x4xf32>
    %52 = arith.mulf %47, %6 : vector<8x4xf32>
    %53 = arith.mulf %48, %5 : vector<8x4xf32>
    %54 = arith.addf %52, %53 : vector<8x4xf32>
    %55 = vector.extract_strided_slice %46 {offsets = [0, 8], sizes = [8, 4], strides = [1, 1]} : vector<8x32xf32> to vector<8x4xf32>
    %56 = vector.extract_strided_slice %46 {offsets = [0, 12], sizes = [8, 4], strides = [1, 1]} : vector<8x32xf32> to vector<8x4xf32>
    %57 = arith.mulf %55, %5 : vector<8x4xf32>
    %58 = arith.mulf %56, %6 : vector<8x4xf32>
    %59 = arith.subf %57, %58 : vector<8x4xf32>
    %60 = arith.mulf %55, %6 : vector<8x4xf32>
    %61 = arith.mulf %56, %5 : vector<8x4xf32>
    %62 = arith.addf %60, %61 : vector<8x4xf32>
    %63 = vector.extract_strided_slice %46 {offsets = [0, 16], sizes = [8, 4], strides = [1, 1]} : vector<8x32xf32> to vector<8x4xf32>
    %64 = vector.extract_strided_slice %46 {offsets = [0, 20], sizes = [8, 4], strides = [1, 1]} : vector<8x32xf32> to vector<8x4xf32>
    %65 = arith.mulf %63, %5 : vector<8x4xf32>
    %66 = arith.mulf %64, %6 : vector<8x4xf32>
    %67 = arith.subf %65, %66 : vector<8x4xf32>
    %68 = arith.mulf %63, %6 : vector<8x4xf32>
    %69 = arith.mulf %64, %5 : vector<8x4xf32>
    %70 = arith.addf %68, %69 : vector<8x4xf32>
    %71 = vector.extract_strided_slice %46 {offsets = [0, 24], sizes = [8, 4], strides = [1, 1]} : vector<8x32xf32> to vector<8x4xf32>
    %72 = vector.extract_strided_slice %46 {offsets = [0, 28], sizes = [8, 4], strides = [1, 1]} : vector<8x32xf32> to vector<8x4xf32>
    %73 = arith.mulf %71, %5 : vector<8x4xf32>
    %74 = arith.mulf %72, %6 : vector<8x4xf32>
    %75 = arith.subf %73, %74 : vector<8x4xf32>
    %76 = arith.mulf %71, %6 : vector<8x4xf32>
    %77 = arith.mulf %72, %5 : vector<8x4xf32>
    %78 = arith.addf %76, %77 : vector<8x4xf32>
    %79 = tpu.concatenate %51, %54, %59, %62, %67, %70, %75, %78 in 1 : vector<8x4xf32>, vector<8x4xf32>, vector<8x4xf32>, vector<8x4xf32>, vector<8x4xf32>, vector<8x4xf32>, vector<8x4xf32>, vector<8x4xf32> -> vector<8x32xf32>
    %80 = arith.truncf %79 : vector<8x32xf32> to vector<8x32xbf16>
    %c0_10 = arith.constant 0 : index
    %c0_11 = arith.constant 0 : index
    %c0_12 = arith.constant 0 : index
    %81 = vector.load %arg6[%c0_10, %c0_11, %c0_12] : memref<1x8x32xbf16, #tpu.memory_space<vmem>>, vector<1x8x32xbf16>
    %82 = vector.shape_cast %81 : vector<1x8x32xbf16> to vector<8x32xbf16>
    %83 = vector.shape_cast %80 : vector<8x32xbf16> to vector<1x8x32xbf16>
    tpu.vector_store %arg6[%c0_10, %c0_11, %c0_12], %83 {strides = array<i32>} : memref<1x8x32xbf16, #tpu.memory_space<vmem>>, vector<1x8x32xbf16>,
    %84 = vector.extract_strided_slice %7 {offsets = [0, 64], sizes = [8, 32], strides = [1, 1]} : vector<8x96xf32> to vector<8x32xf32>
    %85 = arith.truncf %84 : vector<8x32xf32> to vector<8x32xbf16>
    %c0_13 = arith.constant 0 : index
    %c0_14 = arith.constant 0 : index
    %c0_15 = arith.constant 0 : index
    %86 = vector.load %arg7[%c0_13, %c0_14, %c0_15] : memref<1x8x32xbf16, #tpu.memory_space<vmem>>, vector<1x8x32xbf16>
    %87 = vector.shape_cast %86 : vector<1x8x32xbf16> to vector<8x32xbf16>
    %88 = vector.shape_cast %85 : vector<8x32xbf16> to vector<1x8x32xbf16>
    tpu.vector_store %arg7[%c0_13, %c0_14, %c0_15], %88 {strides = array<i32>} : memref<1x8x32xbf16, #tpu.memory_space<vmem>>, vector<1x8x32xbf16>,
    return
  }
  func.func @transform_0(%arg0: i32, %arg1: i32) -> (i32, i32, i32) {
    %c0_i32 = arith.constant 0 : i32
    %c0_i32_0 = arith.constant 0 : i32
    return %arg0, %arg1, %c0_i32 : i32, i32, i32
  }
  func.func @transform_1(%arg0: i32, %arg1: i32) -> (i32, i32) {
    %c0_i32 = arith.constant 0 : i32
    %c0_i32_0 = arith.constant 0 : i32
    %c0_i32_1 = arith.constant 0 : i32
    return %c0_i32, %c0_i32_0 : i32, i32
  }
  func.func @transform_2(%arg0: i32, %arg1: i32) -> (i32, i32, i32) {
    %c0_i32 = arith.constant 0 : i32
    %c0_i32_0 = arith.constant 0 : i32
    return %arg0, %arg1, %c0_i32 : i32, i32, i32
  }
  func.func @transform_3(%arg0: i32, %arg1: i32) -> (i32, i32, i32) {
    %c0_i32 = arith.constant 0 : i32
    %c0_i32_0 = arith.constant 0 : i32
    return %arg0, %arg1, %c0_i32 : i32, i32, i32
  }
  func.func @transform_4(%arg0: i32, %arg1: i32) -> (i32, i32, i32) {
    %c0_i32 = arith.constant 0 : i32
    %c0_i32_0 = arith.constant 0 : i32
    return %arg0, %arg1, %c0_i32 : i32, i32, i32
  }
  func.func @transform_5(%arg0: i32, %arg1: i32) -> (i32, i32, i32) {
    %c0_i32 = arith.constant 0 : i32
    %c0_i32_0 = arith.constant 0 : i32
    return %arg0, %arg1, %c0_i32 : i32, i32, i32
  }
}

module attributes {stable_mosaic.version = 11 : i64} {
  func.func @_qkv_rope_kernel(%arg0: i32, %arg1: i32, %arg2: memref<1x8x32xbf16, #tpu.memory_space<vmem>>, %arg3: memref<32x96xbf16, #tpu.memory_space<vmem>>, %arg4: memref<1x8x8xf32, #tpu.memory_space<vmem>>, %arg5: memref<1x8x32xbf16, #tpu.memory_space<vmem>>, %arg6: memref<1x8x32xbf16, #tpu.memory_space<vmem>>, %arg7: memref<1x8x32xbf16, #tpu.memory_space<vmem>>) attributes {dimension_semantics = [#tpu.dimension_semantics<parallel>, #tpu.dimension_semantics<parallel>], iteration_bounds = array<i64: 2, 1>, scalar_prefetch = 0 : i64, scratch_operands = 0 : i64, tpu.core_type = #tpu.core_type<tc>, window_params = [{transform_indices = @transform_0, window_bounds = array<i64: 1, 8, 32>}, {pipeline_mode = #tpu.pipeline_mode<synchronous>, transform_indices = @transform_1, window_bounds = array<i64: 32, 96>}, {transform_indices = @transform_2, window_bounds = array<i64: 1, 8, 8>}, {transform_indices = @transform_3, window_bounds = array<i64: 1, 8, 32>}, {transform_indices = @transform_4, window_bounds = array<i64: 1, 8, 32>}, {transform_indices = @transform_5, window_bounds = array<i64: 1, 8, 32>}]} {
    %c0 = arith.constant 0 : index
    %c0_0 = arith.constant 0 : index
    %c0_1 = arith.constant 0 : index
    %0 = vector.load %arg2[%c0, %c0_0, %c0_1] : memref<1x8x32xbf16, #tpu.memory_space<vmem>>, vector<1x8x32xbf16>
    %1 = vector.shape_cast %0 : vector<1x8x32xbf16> to vector<8x32xbf16>
    %c0_2 = arith.constant 0 : index
    %c0_3 = arith.constant 0 : index
    %2 = vector.load %arg3[%c0_2, %c0_3] : memref<32x96xbf16, #tpu.memory_space<vmem>>, vector<32x96xbf16>
    %c0_4 = arith.constant 0 : index
    %c0_5 = arith.constant 0 : index
    %c0_6 = arith.constant 0 : index
    %3 = vector.load %arg4[%c0_4, %c0_5, %c0_6] : memref<1x8x8xf32, #tpu.memory_space<vmem>>, vector<1x8x8xf32>
    %4 = vector.shape_cast %3 : vector<1x8x8xf32> to vector<8x8xf32>
    %5 = vector.extract_strided_slice %4 {offsets = [0, 0], sizes = [8, 4], strides = [1, 1]} : vector<8x8xf32> to vector<8x4xf32>
    %6 = vector.extract_strided_slice %4 {offsets = [0, 4], sizes = [8, 4], strides = [1, 1]} : vector<8x8xf32> to vector<8x4xf32>
    %cst = arith.constant dense<0.000000e+00> : vector<8x96xf32>
    %7 = tpu.matmul %1, %2, %cst {dimension_numbers = #tpu.dot_dimension_numbers<[1], [0], [0], [1], [0, 0, 1, 1], [], []>} : vector<8x32xbf16>, vector<32x96xbf16>, vector<8x96xf32> -> vector<8x96xf32>
    %8 = vector.extract_strided_slice %7 {offsets = [0, 0], sizes = [8, 32], strides = [1, 1]} : vector<8x96xf32> to vector<8x32xf32>
    %9 = vector.extract_strided_slice %8 {offsets = [0, 0], sizes = [8, 4], strides = [1, 1]} : vector<8x32xf32> to vector<8x4xf32>
    %10 = vector.extract_strided_slice %8 {offsets = [0, 4], sizes = [8, 4], strides = [1, 1]} : vector<8x32xf32> to vector<8x4xf32>
    %11 = arith.mulf %9, %5 : vector<8x4xf32>
    %12 = arith.mulf %10, %6 : vector<8x4xf32>
    %13 = arith.subf %11, %12 : vector<8x4xf32>
    %14 = arith.mulf %9, %6 : vector<8x4xf32>
    %15 = arith.mulf %10, %5 : vector<8x4xf32>
    %16 = arith.addf %14, %15 : vector<8x4xf32>
    %17 = vector.extract_strided_slice %8 {offsets = [0, 8], sizes = [8, 4], strides = [1, 1]} : vector<8x32xf32> to vector<8x4xf32>
    %18 = vector.extract_strided_slice %8 {offsets = [0, 12], sizes = [8, 4], strides = [1, 1]} : vector<8x32xf32> to vector<8x4xf32>
    %19 = arith.mulf %17, %5 : vector<8x4xf32>
    %20 = arith.mulf %18, %6 : vector<8x4xf32>
    %21 = arith.subf %19, %20 : vector<8x4xf32>
    %22 = arith.mulf %17, %6 : vector<8x4xf32>
    %23 = arith.mulf %18, %5 : vector<8x4xf32>
    %24 = arith.addf %22, %23 : vector<8x4xf32>
    %25 = vector.extract_strided_slice %8 {offsets = [0, 16], sizes = [8, 4], strides = [1, 1]} : vector<8x32xf32> to vector<8x4xf32>
    %26 = vector.extract_strided_slice %8 {offsets = [0, 20], sizes = [8, 4], strides = [1, 1]} : vector<8x32xf32> to vector<8x4xf32>
    %27 = arith.mulf %25, %5 : vector<8x4xf32>
    %28 = arith.mulf %26, %6 : vector<8x4xf32>
    %29 = arith.subf %27, %28 : vector<8x4xf32>
    %30 = arith.mulf %25, %6 : vector<8x4xf32>
    %31 = arith.mulf %26, %5 : vector<8x4xf32>
    %32 = arith.addf %30, %31 : vector<8x4xf32>
    %33 = vector.extract_strided_slice %8 {offsets = [0, 24], sizes = [8, 4], strides = [1, 1]} : vector<8x32xf32> to vector<8x4xf32>
    %34 = vector.extract_strided_slice %8 {offsets = [0, 28], sizes = [8, 4], strides = [1, 1]} : vector<8x32xf32> to vector<8x4xf32>
    %35 = arith.mulf %33, %5 : vector<8x4xf32>
    %36 = arith.mulf %34, %6 : vector<8x4xf32>
    %37 = arith.subf %35, %36 : vector<8x4xf32>
    %38 = arith.mulf %33, %6 : vector<8x4xf32>
    %39 = arith.mulf %34, %5 : vector<8x4xf32>
    %40 = arith.addf %38, %39 : vector<8x4xf32>
    %41 = tpu.concatenate %13, %16, %21, %24, %29, %32, %37, %40 in 1 : vector<8x4xf32>, vector<8x4xf32>, vector<8x4xf32>, vector<8x4xf32>, vector<8x4xf32>, vector<8x4xf32>, vector<8x4xf32>, vector<8x4xf32> -> vector<8x32xf32>
    %42 = arith.truncf %41 : vector<8x32xf32> to vector<8x32xbf16>
    %c0_7 = arith.constant 0 : index
    %c0_8 = arith.constant 0 : index
    %c0_9 = arith.constant 0 : index
    %43 = vector.load %arg5[%c0_7, %c0_8, %c0_9] : memref<1x8x32xbf16, #tpu.memory_space<vmem>>, vector<1x8x32xbf16>
    %44 = vector.shape_cast %43 : vector<1x8x32xbf16> to vector<8x32xbf16>
    %45 = vector.shape_cast %42 : vector<8x32xbf16> to vector<1x8x32xbf16>
    tpu.vector_store %arg5[%c0_7, %c0_8, %c0_9], %45 {strides = array<i32>} : memref<1x8x32xbf16, #tpu.memory_space<vmem>>, vector<1x8x32xbf16>,
    %46 = vector.extract_strided_slice %7 {offsets = [0, 32], sizes = [8, 32], strides = [1, 1]} : vector<8x96xf32> to vector<8x32xf32>
    %47 = vector.extract_strided_slice %46 {offsets = [0, 0], sizes = [8, 4], strides = [1, 1]} : vector<8x32xf32> to vector<8x4xf32>
    %48 = vector.extract_strided_slice %46 {offsets = [0, 4], sizes = [8, 4], strides = [1, 1]} : vector<8x32xf32> to vector<8x4xf32>
    %49 = arith.mulf %47, %5 : vector<8x4xf32>
    %50 = arith.mulf %48, %6 : vector<8x4xf32>
    %51 = arith.subf %49, %50 : vector<8x4xf32>
    %52 = arith.mulf %47, %6 : vector<8x4xf32>
    %53 = arith.mulf %48, %5 : vector<8x4xf32>
    %54 = arith.addf %52, %53 : vector<8x4xf32>
    %55 = vector.extract_strided_slice %46 {offsets = [0, 8], sizes = [8, 4], strides = [1, 1]} : vector<8x32xf32> to vector<8x4xf32>
    %56 = vector.extract_strided_slice %46 {offsets = [0, 12], sizes = [8, 4], strides = [1, 1]} : vector<8x32xf32> to vector<8x4xf32>
    %57 = arith.mulf %55, %5 : vector<8x4xf32>
    %58 = arith.mulf %56, %6 : vector<8x4xf32>
    %59 = arith.subf %57, %58 : vector<8x4xf32>
    %60 = arith.mulf %55, %6 : vector<8x4xf32>
    %61 = arith.mulf %56, %5 : vector<8x4xf32>
    %62 = arith.addf %60, %61 : vector<8x4xf32>
    %63 = vector.extract_strided_slice %46 {offsets = [0, 16], sizes = [8, 4], strides = [1, 1]} : vector<8x32xf32> to vector<8x4xf32>
    %64 = vector.extract_strided_slice %46 {offsets = [0, 20], sizes = [8, 4], strides = [1, 1]} : vector<8x32xf32> to vector<8x4xf32>
    %65 = arith.mulf %63, %5 : vector<8x4xf32>
    %66 = arith.mulf %64, %6 : vector<8x4xf32>
    %67 = arith.subf %65, %66 : vector<8x4xf32>
    %68 = arith.mulf %63, %6 : vector<8x4xf32>
    %69 = arith.mulf %64, %5 : vector<8x4xf32>
    %70 = arith.addf %68, %69 : vector<8x4xf32>
    %71 = vector.extract_strided_slice %46 {offsets = [0, 24], sizes = [8, 4], strides = [1, 1]} : vector<8x32xf32> to vector<8x4xf32>
    %72 = vector.extract_strided_slice %46 {offsets = [0, 28], sizes = [8, 4], strides = [1, 1]} : vector<8x32xf32> to vector<8x4xf32>
    %73 = arith.mulf %71, %5 : vector<8x4xf32>
    %74 = arith.mulf %72, %6 : vector<8x4xf32>
    %75 = arith.subf %73, %74 : vector<8x4xf32>
    %76 = arith.mulf %71, %6 : vector<8x4xf32>
    %77 = arith.mulf %72, %5 : vector<8x4xf32>
    %78 = arith.addf %76, %77 : vector<8x4xf32>
    %79 = tpu.concatenate %51, %54, %59, %62, %67, %70, %75, %78 in 1 : vector<8x4xf32>, vector<8x4xf32>, vector<8x4xf32>, vector<8x4xf32>, vector<8x4xf32>, vector<8x4xf32>, vector<8x4xf32>, vector<8x4xf32> -> vector<8x32xf32>
    %80 = arith.truncf %79 : vector<8x32xf32> to vector<8x32xbf16>
    %c0_10 = arith.constant 0 : index
    %c0_11 = arith.constant 0 : index
    %c0_12 = arith.constant 0 : index
    %81 = vector.load %arg6[%c0_10, %c0_11, %c0_12] : memref<1x8x32xbf16, #tpu.memory_space<vmem>>, vector<1x8x32xbf16>
    %82 = vector.shape_cast %81 : vector<1x8x32xbf16> to vector<8x32xbf16>
    %83 = vector.shape_cast %80 : vector<8x32xbf16> to vector<1x8x32xbf16>
    tpu.vector_store %arg6[%c0_10, %c0_11, %c0_12], %83 {strides = array<i32>} : memref<1x8x32xbf16, #tpu.memory_space<vmem>>, vector<1x8x32xbf16>,
    %84 = vector.extract_strided_slice %7 {offsets = [0, 64], sizes = [8, 32], strides = [1, 1]} : vector<8x96xf32> to vector<8x32xf32>
    %85 = arith.truncf %84 : vector<8x32xf32> to vector<8x32xbf16>
    %c0_13 = arith.constant 0 : index
    %c0_14 = arith.constant 0 : index
    %c0_15 = arith.constant 0 : index
    %86 = vector.load %arg7[%c0_13, %c0_14, %c0_15] : memref<1x8x32xbf16, #tpu.memory_space<vmem>>, vector<1x8x32xbf16>
    %87 = vector.shape_cast %86 : vector<1x8x32xbf16> to vector<8x32xbf16>
    %88 = vector.shape_cast %85 : vector<8x32xbf16> to vector<1x8x32xbf16>
    tpu.vector_store %arg7[%c0_13, %c0_14, %c0_15], %88 {strides = array<i32>} : memref<1x8x32xbf16, #tpu.memory_space<vmem>>, vector<1x8x32xbf16>,
    return
  }
  func.func @transform_0(%arg0: i32, %arg1: i32) -> (i32, i32, i32) {
    %c0_i32 = arith.constant 0 : i32
    %c0_i32_0 = arith.constant 0 : i32
    return %arg0, %arg1, %c0_i32 : i32, i32, i32
  }
  func.func @transform_1(%arg0: i32, %arg1: i32) -> (i32, i32) {
    %c0_i32 = arith.constant 0 : i32
    %c0_i32_0 = arith.constant 0 : i32
    %c0_i32_1 = arith.constant 0 : i32
    return %c0_i32, %c0_i32_0 : i32, i32
  }
  func.func @transform_2(%arg0: i32, %arg1: i32) -> (i32, i32, i32) {
    %c0_i32 = arith.constant 0 : i32
    %c0_i32_0 = arith.constant 0 : i32
    return %arg0, %arg1, %c0_i32 : i32, i32, i32
  }
  func.func @transform_3(%arg0: i32, %arg1: i32) -> (i32, i32, i32) {
    %c0_i32 = arith.constant 0 : i32
    %c0_i32_0 = arith.constant 0 : i32
    return %arg0, %arg1, %c0_i32 : i32, i32, i32
  }
  func.func @transform_4(%arg0: i32, %arg1: i32) -> (i32, i32, i32) {
    %c0_i32 = arith.constant 0 : i32
    %c0_i32_0 = arith.constant 0 : i32
    return %arg0, %arg1, %c0_i32 : i32, i32, i32
  }
  func.func @transform_5(%arg0: i32, %arg1: i32) -> (i32, i32, i32) {
    %c0_i32 = arith.constant 0 : i32
    %c0_i32_0 = arith.constant 0 : i32
    return %arg0, %arg1, %c0_i32 : i32, i32, i32
  }
}

</mosaic_0001>

<llo_original>
// kernel: tpu_custom_call.1
$region0: #{tpu_custom_call.1}
  #allocation0 [shape = 'u32[]', space=smem, size = 0x4, offset = 0x4, fixed_abs, tag = 'smem constant byte address 0x4 - core index']
  #allocation1 [shape = 'u32[144,128]{1,0:T(1,128)}', space=vmem, size = 0x12000, scoped, tag = 'internal scratch']
  %s0 = inlined_call_operand.hbm [shape: bf16[2,8,32], index: 0, kind: input, shape index: {}]
  %s1 = inlined_call_operand.hbm [shape: bf16[32,96], index: 1, kind: input, shape index: {}]
  %s2 = inlined_call_operand.hbm [shape: f32[2,8,8], index: 2, kind: input, shape index: {}]
  %s3 = inlined_call_operand.hbm [shape: bf16[2,8,32], index: 3, kind: output, shape index: {0}]
  %s4 = inlined_call_operand.hbm [shape: bf16[2,8,32], index: 4, kind: output, shape index: {1}]
  %s5 = inlined_call_operand.hbm [shape: bf16[2,8,32], index: 5, kind: output, shape index: {2}]
  %6 = xla_tuple %s3, %s4, %s5
  %s7 = sld [smem:[#allocation0]]
  $region73: #{tpu_custom_call.1} parent=0
    _
  %s9 = ssub.s32 1, %s7
  %s10 = scalar_select 0, %s9, %s7
  $region1: #{tpu_custom_call.1} parent=0
    #allocation2 [shape = 'u8[4096]{0}', space=vmem, size = 0x1000, scoped, tag = 'input window, operand 0']
    #allocation3 [shape = 's32[2]{0}', space=sflag, size = 0x8, scoped, tag = 'scoped memory for tpu_custom_call.1']
    #allocation4 [shape = 's32[2]{0}', space=sflag, size = 0x8, scoped, tag = 'scoped memory for tpu_custom_call.1']
    #allocation5 [shape = 'u8[8192]{0}', space=vmem, size = 0x2000, scoped, tag = 'input window, operand 1, single buffered']
    #allocation6 [shape = 's32[1]{0}', space=sflag, size = 0x4, scoped, tag = 'scoped memory for tpu_custom_call.1']
    #allocation7 [shape = 'u8[8192]{0}', space=vmem, size = 0x2000, scoped, tag = 'input window, operand 2']
    #allocation8 [shape = 'u8[4096]{0}', space=vmem, size = 0x1000, scoped, tag = 'output window, operand 0']
    #allocation9 [shape = 'u8[4096]{0}', space=vmem, size = 0x1000, scoped, tag = 'output window, operand 1']
    #allocation10 [shape = 's32[2]{0}', space=sflag, size = 0x8, scoped, tag = 'scoped memory for tpu_custom_call.1']
    #allocation11 [shape = 'u8[4096]{0}', space=vmem, size = 0x1000, scoped, tag = 'output window, operand 2']
    %11 = vsyncpa [#allocation3], 0
    %s12 = scalar_lea.sflag [#allocation3], 1
    %13 = vsyncpa %s12, 0
    %14 = vsyncpa [#allocation6], 0
    %15 = vsyncpa [#allocation4], 0
    %s16 = scalar_lea.sflag [#allocation4], 1
    %17 = vsyncpa %s16, 0
    %18 = vsyncpa [#allocation10], 0
    %s19 = scalar_lea.sflag [#allocation10], 1
    %20 = vsyncpa %s19, 0
    loop: start=0, step=1, limit=4
    $region2: #{tpu_custom_call.1} parent=1 // loop_pre_header
      _
    $region3: #{tpu_custom_call.1} parent=1 // loop_header
      %s22 = sphi 0, %s26
      %p23 = scmp.ge.s32.totalorder %s22, 4
      %s29 = sphi 0, %s41
      %s30 = sphi 0, %s37
      %s31 = sphi 0, %s29
      %s32 = sphi 0, %s30
      %s33 = sphi 0, %s31
      %s34 = sphi 0, %s32
      %s46 = sphi 0, %s48
      %s49 = sphi 0, %s46
      %s50 = sphi 0, %s49
      %s66 = sphi 0, %s50
      %s70 = sphi 0, %s70
      %s72 = sphi 0, %s70
      %s73 = sphi 0, %s72
      %s87 = sphi 0, %s73
      %s95 = sphi 0, %s97
      %s98 = sphi 0, %s95
      %s99 = sphi 0, %s98
      %s115 = sphi 0, %s99
      %s123 = sphi 0, %s125
      %s126 = sphi 0, %s123
      %s127 = sphi 0, %s126
      %s143 = sphi 0, %s127
      %s151 = sphi 0, %s153
      %s154 = sphi 0, %s151
      %s155 = sphi 0, %s154
      %s171 = sphi 0, %s155
      %s179 = sphi 0, %s181
      %s182 = sphi 0, %s179
      %s183 = sphi 0, %s182
      %s199 = sphi 0, %s183
    $region4: #{tpu_custom_call.1} parent=1 // loop_header_branch
      %25 = sbr.rel (%p23) target = $region8
    $region5: #{tpu_custom_call.1} parent=1 // loop_body
      %s27 = ssub.s32 %s22, 1
      %s28 = ssub.s32 %s22, 2
      %s35 = sadd.s32 1, %s30
      %p36 = scmp.ge.s32.totalorder %s35, 1
      %s37 = scalar_select %p36, 0, %s35
      %s38 = sadd.s32 1, %s29
      %s39 = scalar_select %p36, %s38, %s29
      %p40 = scmp.ge.s32.totalorder %s39, 2
      %s41 = scalar_select %p40, 0, %s39
      %s42 = ssub.s32 %s29, %s41
      %s43 = ssub.s32 %s30, %s37
      %s44 = sor.u32 %s42, %s43
      %p45 = scmp.eq.s32.totalorder %s44, 0
      %s47 = sadd.s32 %s46, 1
      %s48 = scalar_select %p45, %s46, %s47
      %p51 = pneg %p45
      %p52 = scmp.eq.s32.totalorder %s22, 1
      %p53 = por %p51, %p52
      %p54 = scmp.ne.s32.totalorder %s46, %s49
      %p55 = scmp.eq.s32.totalorder %s22, 0
      %p56 = por %p54, %p55
      %p57 = scmp.ne.s32.totalorder %s46, %s49
      %p58 = scmp.eq.s32.totalorder %s27, 1
      %p59 = por %p57, %p58
      %p60 = scmp.ne.s32.totalorder %s49, %s50
      %p61 = scmp.eq.s32.totalorder %s27, 0
      %p62 = por %p60, %p61
      %p63 = scmp.ne.s32.totalorder %s49, %s50
      %p64 = scmp.eq.s32.totalorder %s28, 1
      %p65 = por %p63, %p64
      %p67 = scmp.ne.s32.totalorder %s50, %s66
      %p68 = scmp.eq.s32.totalorder %s28, 0
      %p69 = por %p67, %p68
      %s71 = sadd.s32 %s70, 1
      %p74 = scmp.eq.s32.totalorder %s22, 1
      %p75 = scmp.ne.s32.totalorder %s70, %s72
      %p76 = scmp.eq.s32.totalorder %s22, 0
      %p77 = por %p75, %p76
      %p78 = scmp.ne.s32.totalorder %s70, %s72
      %p79 = scmp.eq.s32.totalorder %s27, 1
      %p80 = por %p78, %p79
      %p81 = scmp.ne.s32.totalorder %s72, %s73
      %p82 = scmp.eq.s32.totalorder %s27, 0
      %p83 = por %p81, %p82
      %p84 = scmp.ne.s32.totalorder %s72, %s73
      %p85 = scmp.eq.s32.totalorder %s28, 1
      %p86 = por %p84, %p85
      %p88 = scmp.ne.s32.totalorder %s73, %s87
      %p89 = scmp.eq.s32.totalorder %s28, 0
      %p90 = por %p88, %p89
      %s91 = ssub.s32 %s29, %s41
      %s92 = ssub.s32 %s30, %s37
      %s93 = sor.u32 %s91, %s92
      %p94 = scmp.eq.s32.totalorder %s93, 0
      %s96 = sadd.s32 %s95, 1
      %s97 = scalar_select %p94, %s95, %s96
      %p100 = pneg %p94
      %p101 = scmp.eq.s32.totalorder %s22, 1
      %p102 = por %p100, %p101
      %p103 = scmp.ne.s32.totalorder %s95, %s98
      %p104 = scmp.eq.s32.totalorder %s22, 0
      %p105 = por %p103, %p104
      %p106 = scmp.ne.s32.totalorder %s95, %s98
      %p107 = scmp.eq.s32.totalorder %s27, 1
      %p108 = por %p106, %p107
      %p109 = scmp.ne.s32.totalorder %s98, %s99
      %p110 = scmp.eq.s32.totalorder %s27, 0
      %p111 = por %p109, %p110
      %p112 = scmp.ne.s32.totalorder %s98, %s99
      %p113 = scmp.eq.s32.totalorder %s28, 1
      %p114 = por %p112, %p113
      %p116 = scmp.ne.s32.totalorder %s99, %s115
      %p117 = scmp.eq.s32.totalorder %s28, 0
      %p118 = por %p116, %p117
      %s119 = ssub.s32 %s29, %s41
      %s120 = ssub.s32 %s30, %s37
      %s121 = sor.u32 %s119, %s120
      %p122 = scmp.eq.s32.totalorder %s121, 0
      %s124 = sadd.s32 %s123, 1
      %s125 = scalar_select %p122, %s123, %s124
      %p128 = pneg %p122
      %p129 = scmp.eq.s32.totalorder %s22, 1
      %p130 = por %p128, %p129
      %p131 = scmp.ne.s32.totalorder %s123, %s126
      %p132 = scmp.eq.s32.totalorder %s22, 0
      %p133 = por %p131, %p132
      %p134 = scmp.ne.s32.totalorder %s123, %s126
      %p135 = scmp.eq.s32.totalorder %s27, 1
      %p136 = por %p134, %p135
      %p137 = scmp.ne.s32.totalorder %s126, %s127
      %p138 = scmp.eq.s32.totalorder %s27, 0
      %p139 = por %p137, %p138
      %p140 = scmp.ne.s32.totalorder %s126, %s127
      %p141 = scmp.eq.s32.totalorder %s28, 1
      %p142 = por %p140, %p141
      %p144 = scmp.ne.s32.totalorder %s127, %s143
      %p145 = scmp.eq.s32.totalorder %s28, 0
      %p146 = por %p144, %p145
      %s147 = ssub.s32 %s29, %s41
      %s148 = ssub.s32 %s30, %s37
      %s149 = sor.u32 %s147, %s148
      %p150 = scmp.eq.s32.totalorder %s149, 0
      %s152 = sadd.s32 %s151, 1
      %s153 = scalar_select %p150, %s151, %s152
      %p156 = pneg %p150
      %p157 = scmp.eq.s32.totalorder %s22, 1
      %p158 = por %p156, %p157
      %p159 = scmp.ne.s32.totalorder %s151, %s154
      %p160 = scmp.eq.s32.totalorder %s22, 0
      %p161 = por %p159, %p160
      %p162 = scmp.ne.s32.totalorder %s151, %s154
      %p163 = scmp.eq.s32.totalorder %s27, 1
      %p164 = por %p162, %p163
      %p165 = scmp.ne.s32.totalorder %s154, %s155
      %p166 = scmp.eq.s32.totalorder %s27, 0
      %p167 = por %p165, %p166
      %p168 = scmp.ne.s32.totalorder %s154, %s155
      %p169 = scmp.eq.s32.totalorder %s28, 1
      %p170 = por %p168, %p169
      %p172 = scmp.ne.s32.totalorder %s155, %s171
      %p173 = scmp.eq.s32.totalorder %s28, 0
      %p174 = por %p172, %p173
      %s175 = ssub.s32 %s29, %s41
      %s176 = ssub.s32 %s30, %s37
      %s177 = sor.u32 %s175, %s176
      %p178 = scmp.eq.s32.totalorder %s177, 0
      %s180 = sadd.s32 %s179, 1
      %s181 = scalar_select %p178, %s179, %s180
      %p184 = pneg %p178
      %p185 = scmp.eq.s32.totalorder %s22, 1
      %p186 = por %p184, %p185
      %p187 = scmp.ne.s32.totalorder %s179, %s182
      %p188 = scmp.eq.s32.totalorder %s22, 0
      %p189 = por %p187, %p188
      %p190 = scmp.ne.s32.totalorder %s179, %s182
      %p191 = scmp.eq.s32.totalorder %s27, 1
      %p192 = por %p190, %p191
      %p193 = scmp.ne.s32.totalorder %s182, %s183
      %p194 = scmp.eq.s32.totalorder %s27, 0
      %p195 = por %p193, %p194
      %p196 = scmp.ne.s32.totalorder %s182, %s183
      %p197 = scmp.eq.s32.totalorder %s28, 1
      %p198 = por %p196, %p197
      %p200 = scmp.ne.s32.totalorder %s183, %s199
      %p201 = scmp.eq.s32.totalorder %s28, 0
      %p202 = por %p200, %p201
      %p203 = scmp.le.s32.totalorder 1, %s22
      %p204 = scmp.lt.s32.totalorder %s22, 3
      %p205 = pnand %p203, %p204
      %p206 = pneg %p205
      // Predicated region
      $region9: #{tpu_custom_call.1} parent=5 // pred_check
        _
      $region10: #{tpu_custom_call.1} parent=5 // pred_check_branch
        %208 = sbr.rel (%p205) target = $region12
      $region11: #{tpu_custom_call.1} parent=5 // pred_region
        %s209 = ssub.s32 %s22, 1
        // Predicated region
        $region13: #{tpu_custom_call.1} parent=11 // pred_check
          %p210 = pneg %p83
        $region14: #{tpu_custom_call.1} parent=11 // pred_check_branch
          %212 = sbr.rel (%p210) target = $region16
        $region15: #{tpu_custom_call.1} parent=11 // pred_region
          %s214 = ssub.s32 256, 256
          %215 = vsyncadd [#allocation6], %s214
          %s216 = sshll.u32 [#allocation5], 4
          %s217 = int_to_ptr.vmem [resolvable:$true] %s216
          %222 = dma.hbm_to_vmem [thread:$0]  %s1, 256, %s217, [#allocation6], 64, 64, 4
        $region16: #{tpu_custom_call.1} parent=11 // pred_fallthru
          _
      $region12: #{tpu_custom_call.1} parent=5 // pred_fallthru
        _
      %p223 = scmp.lt.s32.totalorder %s22, 2
      // Predicated region
      $region17: #{tpu_custom_call.1} parent=5 // pred_check
        %p224 = pneg %p223
      $region18: #{tpu_custom_call.1} parent=5 // pred_check_branch
        %226 = sbr.rel (%p224) target = $region20
      $region19: #{tpu_custom_call.1} parent=5 // pred_region
        // Predicated region
        $region21: #{tpu_custom_call.1} parent=19 // pred_check
          %p227 = pneg %p56
        $region22: #{tpu_custom_call.1} parent=19 // pred_check_branch
          %229 = sbr.rel (%p227) target = $region24
        $region23: #{tpu_custom_call.1} parent=19 // pred_region
          %s230 = sand.u32 %s22, 1
          %s231 = scalar_lea.sflag [#allocation3], %s230
          %s232 = sand.u32 %s46, 1
          %s233 = smul.addr %s232, 4
          %s234 = scalar_lea.vmem [#allocation2], %s233
          %s236 = ssub.s32 64, 64
          %237 = vsyncadd %s231, %s236
          %s238 = sadd.s32 %s30, %s29
          %s239 = smul.addr %s238, 64
          %s240 = scalar_lea.hbm %s0, %s239
          %s242 = sshll.u32 %s234, 4
          %s243 = int_to_ptr.vmem [resolvable:$true] %s242
          %245 = dma.hbm_to_vmem [thread:$0]  %s240, 64, %s243, %s231
        $region24: #{tpu_custom_call.1} parent=19 // pred_fallthru
          _
        // Predicated region
        $region25: #{tpu_custom_call.1} parent=19 // pred_check
          %p246 = pneg %p105
        $region26: #{tpu_custom_call.1} parent=19 // pred_check_branch
          %248 = sbr.rel (%p246) target = $region28
        $region27: #{tpu_custom_call.1} parent=19 // pred_region
          %s249 = sand.u32 %s22, 1
          %s250 = scalar_lea.sflag [#allocation3], %s249
          %s251 = sand.u32 %s95, 1
          %s252 = smul.addr %s251, 8
          %s253 = scalar_lea.vmem [#allocation7], %s252
          %s255 = ssub.s32 128, 128
          %256 = vsyncadd %s250, %s255
          %s257 = sadd.s32 %s30, %s29
          %s258 = smul.addr %s257, 128
          %s259 = scalar_lea.hbm %s2, %s258
          %s261 = sshll.u32 %s253, 4
          %s262 = int_to_ptr.vmem [resolvable:$true] %s261
          %264 = dma.hbm_to_vmem [thread:$0]  %s259, 128, %s262, %s250
        $region28: #{tpu_custom_call.1} parent=19 // pred_fallthru
          _
      $region20: #{tpu_custom_call.1} parent=5 // pred_fallthru
        _
      %p265 = scmp.le.s32.totalorder 1, %s22
      %p266 = scmp.lt.s32.totalorder %s22, 3
      %p267 = pnand %p265, %p266
      %p268 = pneg %p267
      // Predicated region
      $region29: #{tpu_custom_call.1} parent=5 // pred_check
        _
      $region30: #{tpu_custom_call.1} parent=5 // pred_check_branch
        %270 = sbr.rel (%p267) target = $region32
      $region31: #{tpu_custom_call.1} parent=5 // pred_region
        %s271 = ssub.s32 %s22, 1
        %s272 = sand.u32 %s27, 1
        %s273 = scalar_lea.sflag [#allocation3], %s272
        %s274 = sand.u32 %s49, 1
        %s275 = smul.addr %s274, 4
        %s276 = scalar_lea.vmem [#allocation2], %s275
        // Predicated region
        $region33: #{tpu_custom_call.1} parent=31 // pred_check
          %p277 = pneg %p62
        $region34: #{tpu_custom_call.1} parent=31 // pred_check_branch
          %279 = sbr.rel (%p277) target = $region36
        $region35: #{tpu_custom_call.1} parent=31 // pred_region
          %280 = dma.done %s273, 64
        $region36: #{tpu_custom_call.1} parent=31 // pred_fallthru
          _
        // Predicated region
        $region37: #{tpu_custom_call.1} parent=31 // pred_check
          %p281 = pneg %p83
        $region38: #{tpu_custom_call.1} parent=31 // pred_check_branch
          %283 = sbr.rel (%p281) target = $region40
        $region39: #{tpu_custom_call.1} parent=31 // pred_region
          %284 = dma.done [#allocation6], 256
        $region40: #{tpu_custom_call.1} parent=31 // pred_fallthru
          _
        %s285 = sand.u32 %s27, 1
        %s286 = scalar_lea.sflag [#allocation3], %s285
        %s287 = sand.u32 %s98, 1
        %s288 = smul.addr %s287, 8
        %s289 = scalar_lea.vmem [#allocation7], %s288
        // Predicated region
        $region41: #{tpu_custom_call.1} parent=31 // pred_check
          %p290 = pneg %p111
        $region42: #{tpu_custom_call.1} parent=31 // pred_check_branch
          %292 = sbr.rel (%p290) target = $region44
        $region43: #{tpu_custom_call.1} parent=31 // pred_region
          %293 = dma.done %s286, 128
        $region44: #{tpu_custom_call.1} parent=31 // pred_fallthru
          _
        %s294 = sand.u32 %s27, 1
        %s295 = scalar_lea.sflag [#allocation3], %s294
        %s296 = sand.u32 %s49, 1
        %s297 = smul.addr %s296, 4
        %s298 = scalar_lea.vmem [#allocation2], %s297
        %p299 = pneg %p62
        %p300 = pneg %p59
        %p301 = pneg %p83
        %p302 = pneg %p80
        %s303 = sand.u32 %s27, 1
        %s304 = scalar_lea.sflag [#allocation3], %s303
        %s305 = sand.u32 %s98, 1
        %s306 = smul.addr %s305, 8
        %s307 = scalar_lea.vmem [#allocation7], %s306
        %p308 = pneg %p111
        %p309 = pneg %p108
        %p310 = pneg %p139
        %p311 = pneg %p136
        %s312 = sand.u32 %s126, 1
        %s313 = scalar_lea.sflag [#allocation4], %s312
        %s314 = sand.u32 %s126, 1
        %s315 = smul.addr %s314, 4
        %s316 = scalar_lea.vmem [#allocation8], %s315
        %p317 = pneg %p167
        %p318 = pneg %p164
        %s319 = sand.u32 %s27, 1
        %s320 = scalar_lea.sflag [#allocation10], %s319
        %s321 = sand.u32 %s154, 1
        %s322 = smul.addr %s321, 4
        %s323 = scalar_lea.vmem [#allocation9], %s322
        %p324 = pneg %p195
        %p325 = pneg %p192
        %s326 = sand.u32 %s27, 1
        %s327 = scalar_lea.sflag [#allocation10], %s326
        %s328 = sand.u32 %s182, 1
        %s329 = smul.addr %s328, 4
        %s330 = scalar_lea.vmem [#allocation11], %s329
        %v332 = vld [vmem:[%s276] sm:$0xf]
        %v333 = vld [vmem:[#allocation5] sm:$0xf]
        %v334 = vld [vmem:[#allocation5 + $0x4] sm:$0xf]
        %v335 = vld [vmem:[#allocation5 + $0x8] sm:$0xf]
        %v336 = vld [vmem:[#allocation5 + $0xc] sm:$0xf]
        %v337 = vld [vmem:[%s289] sm:$0xff]
        %v342 = vunpack.c.l.b16 %v333
        %v343 = vunpack.c.l.b16 %v334
        %v344 = vunpack.c.l.b16 %v335
        %v345 = vunpack.c.l.b16 %v336
        %v346 = vpack.c.b16 %v343, %v342
        %v347 = vpack.c.b16 %v345, %v344
        %vm350 = vcmask 261120
        %v352 = vsel %vm350, %v332, 0
        %354 = vmatprep.subr.bf16.mxu0 0
        %355 = vmatpush1.bf16.msra.mxu0 %v346
        %356 = vmatprep.subr.bf16.mxu0 0
        %357 = vmatpush1.bf16.msra.mxu0 %v347
        %358 = vmatprep.subr.bf16.mxu0 0
        %359 = vmatpush1.bf16.msra.mxu0 0
        %360 = vmatprep.subr.bf16.mxu0 0
        %361 = vmatpush1.bf16.msra.mxu0 0
        %362 = vmatprep.subr.bf16.mxu0 0
        %363 = vmatpush1.bf16.msra.mxu0 0
        %364 = vmatprep.subr.bf16.mxu0 0
        %365 = vmatpush1.bf16.msra.mxu0 0
        %366 = vmatprep.subr.bf16.mxu0 0
        %367 = vmatpush1.bf16.msra.mxu0 0
        %368 = vmatprep.subr.bf16.mxu0 0
        %369 = vmatpush1.bf16.msra.mxu0 0
        %370 = vmatprep.subr.bf16.mxu0 0
        %371 = vmatpush1.bf16.msra.mxu0 0
        %372 = vmatprep.subr.bf16.mxu0 0
        %373 = vmatpush1.bf16.msra.mxu0 0
        %374 = vmatprep.subr.bf16.mxu0 0
        %375 = vmatpush1.bf16.msra.mxu0 0
        %376 = vmatprep.subr.bf16.mxu0 0
        %377 = vmatpush1.bf16.msra.mxu0 0
        %378 = vmatprep.subr.bf16.mxu0 0
        %379 = vmatpush1.bf16.msra.mxu0 0
        %380 = vmatprep.subr.bf16.mxu0 0
        %381 = vmatpush1.bf16.msra.mxu0 0
        %382 = vmatprep.subr.bf16.mxu0 0
        %383 = vmatpush1.bf16.msra.mxu0 0
        %384 = vmatprep.subr.bf16.mxu0 0
        %385 = vmatpush1.bf16.msra.mxu0 0
        %386 = vmatprep.mubr.bf16.mxu0 0
        %387 = vmatmul.mubr.bf16.gmra.mrb[0].mxu0 %v352
        %v388 = vpop.f32.mrb[0].mxu0
        %v389 = vadd.f32 0.0, %v388
        %v390 = vpop.f32.mrb[0].mxu0
        %v391 = vpop.f32.mrb[0].mxu0
        %v392 = vpop.f32.mrb[0].mxu0
        %393 = vdwg.mxu0
        %v394 = vmul.f32 %v389, %v337
        %396 = vrot.lane.b32.xlu0 %v394, 124
        %v397 = vpop.permute.xlu0 %396
        %v399 = vsub.f32 %v394, %v397
        %401 = vrot.lane.b32.xlu0 %v337, 124
        %v402 = vpop.permute.xlu0 %401
        %v404 = vmul.f32 %v389, %v402
        %405 = vrot.lane.b32.xlu0 %v337, 4
        %v406 = vpop.permute.xlu0 %405
        %v408 = vmul.f32 %v389, %v406
        %410 = vrot.lane.b32.xlu0 %v408, 124
        %v411 = vpop.permute.xlu0 %410
        %v413 = vadd.f32 %v404, %v411
        %414 = vrot.lane.b32.xlu0 %v337, 8
        %v415 = vpop.permute.xlu0 %414
        %v417 = vmul.f32 %v389, %v415
        %419 = vrot.lane.b32.xlu0 %v417, 124
        %v420 = vpop.permute.xlu0 %419
        %v422 = vsub.f32 %v417, %v420
        %423 = vrot.lane.b32.xlu0 %v337, 12
        %v424 = vpop.permute.xlu0 %423
        %v426 = vmul.f32 %v389, %v424
        %428 = vrot.lane.b32.xlu0 %v426, 124
        %v429 = vpop.permute.xlu0 %428
        %v431 = vadd.f32 %v408, %v429
        %432 = vrot.lane.b32.xlu0 %v337, 16
        %v433 = vpop.permute.xlu0 %432
        %v435 = vmul.f32 %v389, %v433
        %437 = vrot.lane.b32.xlu0 %v435, 124
        %v438 = vpop.permute.xlu0 %437
        %v440 = vsub.f32 %v435, %v438
        %441 = vrot.lane.b32.xlu0 %v337, 20
        %v442 = vpop.permute.xlu0 %441
        %v444 = vmul.f32 %v389, %v442
        %446 = vrot.lane.b32.xlu0 %v444, 124
        %v447 = vpop.permute.xlu0 %446
        %v449 = vadd.f32 %v426, %v447
        %450 = vrot.lane.b32.xlu0 %v337, 24
        %v451 = vpop.permute.xlu0 %450
        %v453 = vmul.f32 %v389, %v451
        %455 = vrot.lane.b32.xlu0 %v453, 124
        %v456 = vpop.permute.xlu0 %455
        %v458 = vsub.f32 %v453, %v456
        %459 = vrot.lane.b32.xlu0 %v337, 28
        %v460 = vpop.permute.xlu0 %459
        %v462 = vmul.f32 %v389, %v460
        %464 = vrot.lane.b32.xlu0 %v462, 124
        %v465 = vpop.permute.xlu0 %464
        %v467 = vadd.f32 %v444, %v465
        %469 = vrot.lane.b32.xlu0 %v413, 4
        %v470 = vpop.permute.xlu0 %469
        %473 = vrot.lane.b32.xlu0 %v431, 4
        %v474 = vpop.permute.xlu0 %473
        %477 = vrot.lane.b32.xlu0 %v449, 4
        %v478 = vpop.permute.xlu0 %477
        %481 = vrot.lane.b32.xlu0 %v467, 4
        %v482 = vpop.permute.xlu0 %481
        %vm484 = vcmask 31744
        %v485 = vsel %vm484, %v399, %v470
        %vm486 = vcmask 64512
        %v487 = vsel %vm486, %v485, %v422
        %vm488 = vcmask 97280
        %v489 = vsel %vm488, %v487, %v474
        %vm490 = vcmask 130048
        %v491 = vsel %vm490, %v489, %v440
        %vm492 = vcmask 162816
        %v493 = vsel %vm492, %v491, %v478
        %vm494 = vcmask 195584
        %v495 = vsel %vm494, %v493, %v458
        %vm496 = vcmask 228352
        %v497 = vsel %vm496, %v495, %v482
        %v498 = vpack.c.bf16 %v497, %v497
        %vm499 = vcmask 257024
        %500 = vst.msk [vmem:[%s316] sm:$0xf] %vm499, %v498
        %501 = vrot.lane.b32.xlu0 %v337, 32
        %v502 = vpop.permute.xlu0 %501
        %v504 = vmul.f32 %v389, %v502
        %506 = vrot.lane.b32.xlu0 %v504, 124
        %v507 = vpop.permute.xlu0 %506
        %v509 = vsub.f32 %v504, %v507
        %510 = vrot.lane.b32.xlu0 %v337, 36
        %v511 = vpop.permute.xlu0 %510
        %v513 = vmul.f32 %v389, %v511
        %515 = vrot.lane.b32.xlu0 %v513, 124
        %v516 = vpop.permute.xlu0 %515
        %v518 = vadd.f32 %v462, %v516
        %519 = vrot.lane.b32.xlu0 %v337, 40
        %v520 = vpop.permute.xlu0 %519
        %v522 = vmul.f32 %v389, %v520
        %524 = vrot.lane.b32.xlu0 %v522, 124
        %v525 = vpop.permute.xlu0 %524
        %v527 = vsub.f32 %v522, %v525
        %528 = vrot.lane.b32.xlu0 %v337, 44
        %v529 = vpop.permute.xlu0 %528
        %v531 = vmul.f32 %v389, %v529
        %533 = vrot.lane.b32.xlu0 %v531, 124
        %v534 = vpop.permute.xlu0 %533
        %v536 = vadd.f32 %v513, %v534
        %537 = vrot.lane.b32.xlu0 %v337, 48
        %v538 = vpop.permute.xlu0 %537
        %v540 = vmul.f32 %v389, %v538
        %542 = vrot.lane.b32.xlu0 %v540, 124
        %v543 = vpop.permute.xlu0 %542
        %v545 = vsub.f32 %v540, %v543
        %546 = vrot.lane.b32.xlu0 %v337, 52
        %v547 = vpop.permute.xlu0 %546
        %v549 = vmul.f32 %v389, %v547
        %551 = vrot.lane.b32.xlu0 %v549, 124
        %v552 = vpop.permute.xlu0 %551
        %v554 = vadd.f32 %v531, %v552
        %555 = vrot.lane.b32.xlu0 %v337, 56
        %v556 = vpop.permute.xlu0 %555
        %v558 = vmul.f32 %v389, %v556
        %560 = vrot.lane.b32.xlu0 %v558, 124
        %v561 = vpop.permute.xlu0 %560
        %v563 = vsub.f32 %v558, %v561
        %564 = vrot.lane.b32.xlu0 %v337, 60
        %v565 = vpop.permute.xlu0 %564
        %v567 = vmul.f32 %v389, %v565
        %569 = vrot.lane.b32.xlu0 %v567, 124
        %v570 = vpop.permute.xlu0 %569
        %v572 = vadd.f32 %v549, %v570
        %574 = vrot.lane.b32.xlu0 %v509, 96
        %v575 = vpop.permute.xlu0 %574
        %578 = vrot.lane.b32.xlu0 %v518, 100
        %v579 = vpop.permute.xlu0 %578
        %582 = vrot.lane.b32.xlu0 %v527, 96
        %v583 = vpop.permute.xlu0 %582
        %586 = vrot.lane.b32.xlu0 %v536, 100
        %v587 = vpop.permute.xlu0 %586
        %590 = vrot.lane.b32.xlu0 %v545, 96
        %v591 = vpop.permute.xlu0 %590
        %594 = vrot.lane.b32.xlu0 %v554, 100
        %v595 = vpop.permute.xlu0 %594
        %598 = vrot.lane.b32.xlu0 %v563, 96
        %v599 = vpop.permute.xlu0 %598
        %602 = vrot.lane.b32.xlu0 %v572, 100
        %v603 = vpop.permute.xlu0 %602
        %v605 = vsel %vm484, %v575, %v579
        %v606 = vsel %vm486, %v605, %v583
        %v607 = vsel %vm488, %v606, %v587
        %v608 = vsel %vm490, %v607, %v591
        %v609 = vsel %vm492, %v608, %v595
        %v610 = vsel %vm494, %v609, %v599
        %v611 = vsel %vm496, %v610, %v603
        %v612 = vpack.c.bf16 %v611, %v611
        %613 = vst.msk [vmem:[%s323] sm:$0xf] %vm499, %v612
        %v614 = vpack.c.bf16 %v389, %v389
        %v616 = vunpack.c.l.b16 %v614
        %v617 = vpack.c.b16 %v616, %v616
        %618 = vrot.lane.b32.xlu0 %v617, 64
        %v619 = vpop.permute.xlu0 %618
        %621 = vst.msk [vmem:[%s330] sm:$0xf] %vm499, %v619
        %s622 = sand.u32 %s126, 1
        %s623 = scalar_lea.sflag [#allocation4], %s622
        %s624 = sand.u32 %s126, 1
        %s625 = smul.addr %s624, 4
        %s626 = scalar_lea.vmem [#allocation8], %s625
        %s627 = sand.u32 %s27, 1
        %s628 = scalar_lea.sflag [#allocation10], %s627
        %s629 = sand.u32 %s154, 1
        %s630 = smul.addr %s629, 4
        %s631 = scalar_lea.vmem [#allocation9], %s630
        %s632 = sand.u32 %s27, 1
        %s633 = scalar_lea.sflag [#allocation10], %s632
        %s634 = sand.u32 %s182, 1
        %s635 = smul.addr %s634, 4
        %s636 = scalar_lea.vmem [#allocation11], %s635
        // Predicated region
        $region45: #{tpu_custom_call.1} parent=31 // pred_check
          %p637 = pneg %p136
        $region46: #{tpu_custom_call.1} parent=31 // pred_check_branch
          %639 = sbr.rel (%p637) target = $region48
        $region47: #{tpu_custom_call.1} parent=31 // pred_region
          %s641 = ssub.s32 64, 64
          %642 = vsyncadd %s623, %s641
          %s643 = sadd.s32 %s32, %s31
          %s644 = smul.addr %s643, 64
          %s645 = scalar_lea.hbm %s3, %s644
          %s647 = sshll.u32 %s626, 4
          %s648 = int_to_ptr.vmem [resolvable:$true] %s647
          %650 = dma.vmem_to_hbm [thread:$0]  %s648, 64, %s645, %s623
        $region48: #{tpu_custom_call.1} parent=31 // pred_fallthru
          _
        // Predicated region
        $region49: #{tpu_custom_call.1} parent=31 // pred_check
          %p651 = pneg %p164
        $region50: #{tpu_custom_call.1} parent=31 // pred_check_branch
          %653 = sbr.rel (%p651) target = $region52
        $region51: #{tpu_custom_call.1} parent=31 // pred_region
          %s655 = ssub.s32 64, 64
          %656 = vsyncadd %s628, %s655
          %s657 = sadd.s32 %s32, %s31
          %s658 = smul.addr %s657, 64
          %s659 = scalar_lea.hbm %s4, %s658
          %s661 = sshll.u32 %s631, 4
          %s662 = int_to_ptr.vmem [resolvable:$true] %s661
          %664 = dma.vmem_to_hbm [thread:$0]  %s662, 64, %s659, %s628
        $region52: #{tpu_custom_call.1} parent=31 // pred_fallthru
          _
        // Predicated region
        $region53: #{tpu_custom_call.1} parent=31 // pred_check
          %p665 = pneg %p192
        $region54: #{tpu_custom_call.1} parent=31 // pred_check_branch
          %667 = sbr.rel (%p665) target = $region56
        $region55: #{tpu_custom_call.1} parent=31 // pred_region
          %s669 = ssub.s32 64, 64
          %670 = vsyncadd %s633, %s669
          %s671 = sadd.s32 %s32, %s31
          %s672 = smul.addr %s671, 64
          %s673 = scalar_lea.hbm %s5, %s672
          %s675 = sshll.u32 %s636, 4
          %s676 = int_to_ptr.vmem [resolvable:$true] %s675
          %678 = dma.vmem_to_hbm [thread:$0]  %s676, 64, %s673, %s633
        $region56: #{tpu_custom_call.1} parent=31 // pred_fallthru
          _
      $region32: #{tpu_custom_call.1} parent=5 // pred_fallthru
        _
      %p679 = scmp.le.s32.totalorder 2, %s22
      // Predicated region
      $region57: #{tpu_custom_call.1} parent=5 // pred_check
        %p680 = pneg %p679
      $region58: #{tpu_custom_call.1} parent=5 // pred_check_branch
        %682 = sbr.rel (%p680) target = $region60
      $region59: #{tpu_custom_call.1} parent=5 // pred_region
        %s683 = ssub.s32 %s22, 2
        // Predicated region
        $region61: #{tpu_custom_call.1} parent=59 // pred_check
          %p684 = pneg %p142
        $region62: #{tpu_custom_call.1} parent=59 // pred_check_branch
          %686 = sbr.rel (%p684) target = $region64
        $region63: #{tpu_custom_call.1} parent=59 // pred_region
          %s687 = sand.u32 %s127, 1
          %s688 = scalar_lea.sflag [#allocation4], %s687
          %s689 = sand.u32 %s127, 1
          %s690 = smul.addr %s689, 4
          %s691 = scalar_lea.vmem [#allocation8], %s690
          %692 = dma.done %s688, 64
        $region64: #{tpu_custom_call.1} parent=59 // pred_fallthru
          _
        // Predicated region
        $region65: #{tpu_custom_call.1} parent=59 // pred_check
          %p693 = pneg %p170
        $region66: #{tpu_custom_call.1} parent=59 // pred_check_branch
          %695 = sbr.rel (%p693) target = $region68
        $region67: #{tpu_custom_call.1} parent=59 // pred_region
          %s696 = sand.u32 %s28, 1
          %s697 = scalar_lea.sflag [#allocation10], %s696
          %s698 = sand.u32 %s155, 1
          %s699 = smul.addr %s698, 4
          %s700 = scalar_lea.vmem [#allocation9], %s699
          %701 = dma.done %s697, 64
        $region68: #{tpu_custom_call.1} parent=59 // pred_fallthru
          _
        // Predicated region
        $region69: #{tpu_custom_call.1} parent=59 // pred_check
          %p702 = pneg %p198
        $region70: #{tpu_custom_call.1} parent=59 // pred_check_branch
          %704 = sbr.rel (%p702) target = $region72
        $region71: #{tpu_custom_call.1} parent=59 // pred_region
          %s705 = sand.u32 %s28, 1
          %s706 = scalar_lea.sflag [#allocation10], %s705
          %s707 = sand.u32 %s183, 1
          %s708 = smul.addr %s707, 4
          %s709 = scalar_lea.vmem [#allocation11], %s708
          %710 = dma.done %s706, 64
        $region72: #{tpu_custom_call.1} parent=59 // pred_fallthru
          _
      $region60: #{tpu_custom_call.1} parent=5 // pred_fallthru
        _
    $region6: #{tpu_custom_call.1} parent=1 // loop_footer
      %s26 = sadd.s32 1, %s22
    $region7: #{tpu_custom_call.1} parent=1 // loop_footer_branch
      %21 = sbr.rel target = $region3
    $region8: #{tpu_custom_call.1} parent=1 // loop_exit
      _
    %711 = vsyncpa [#allocation3], 1
    %s712 = scalar_lea.sflag [#allocation3], 1
    %713 = vsyncpa %s712, 1
    %714 = vsyncpa [#allocation6], 1
    %715 = vsyncpa [#allocation4], 1
    %s716 = scalar_lea.sflag [#allocation4], 1
    %717 = vsyncpa %s716, 1
    %718 = vsyncpa [#allocation10], 1
    %s719 = scalar_lea.sflag [#allocation10], 1
    %720 = vsyncpa %s719, 1

// kernel: tpu_custom_call.1
$region0: #{tpu_custom_call.1}
  #allocation0 [shape = 'u32[]', space=smem, size = 0x4, offset = 0x4, fixed_abs, tag = 'smem constant byte address 0x4 - core index']
  #allocation1 [shape = 'u32[144,128]{1,0:T(1,128)}', space=vmem, size = 0x12000, scoped, tag = 'internal scratch']
  %s0 = inlined_call_operand.hbm [shape: bf16[2,8,32], index: 0, kind: input, shape index: {}]
  %s1 = inlined_call_operand.hbm [shape: bf16[32,96], index: 1, kind: input, shape index: {}]
  %s2 = inlined_call_operand.hbm [shape: f32[2,8,8], index: 2, kind: input, shape index: {}]
  %s3 = inlined_call_operand.hbm [shape: bf16[2,8,32], index: 3, kind: output, shape index: {0}]
  %s4 = inlined_call_operand.hbm [shape: bf16[2,8,32], index: 4, kind: output, shape index: {1}]
  %s5 = inlined_call_operand.hbm [shape: bf16[2,8,32], index: 5, kind: output, shape index: {2}]
  %6 = xla_tuple %s3, %s4, %s5
  %s7 = sld [smem:[#allocation0]]
  $region73: #{tpu_custom_call.1} parent=0
    _
  %s9 = ssub.s32 1, %s7
  %s10 = scalar_select 0, %s9, %s7
  $region1: #{tpu_custom_call.1} parent=0
    #allocation2 [shape = 'u8[4096]{0}', space=vmem, size = 0x1000, scoped, tag = 'input window, operand 0']
    #allocation3 [shape = 's32[2]{0}', space=sflag, size = 0x8, scoped, tag = 'scoped memory for tpu_custom_call.1']
    #allocation4 [shape = 's32[2]{0}', space=sflag, size = 0x8, scoped, tag = 'scoped memory for tpu_custom_call.1']
    #allocation5 [shape = 'u8[8192]{0}', space=vmem, size = 0x2000, scoped, tag = 'input window, operand 1, single buffered']
    #allocation6 [shape = 's32[1]{0}', space=sflag, size = 0x4, scoped, tag = 'scoped memory for tpu_custom_call.1']
    #allocation7 [shape = 'u8[8192]{0}', space=vmem, size = 0x2000, scoped, tag = 'input window, operand 2']
    #allocation8 [shape = 'u8[4096]{0}', space=vmem, size = 0x1000, scoped, tag = 'output window, operand 0']
    #allocation9 [shape = 'u8[4096]{0}', space=vmem, size = 0x1000, scoped, tag = 'output window, operand 1']
    #allocation10 [shape = 's32[2]{0}', space=sflag, size = 0x8, scoped, tag = 'scoped memory for tpu_custom_call.1']
    #allocation11 [shape = 'u8[4096]{0}', space=vmem, size = 0x1000, scoped, tag = 'output window, operand 2']
    %11 = vsyncpa [#allocation3], 0
    %s12 = scalar_lea.sflag [#allocation3], 1
    %13 = vsyncpa %s12, 0
    %14 = vsyncpa [#allocation6], 0
    %15 = vsyncpa [#allocation4], 0
    %s16 = scalar_lea.sflag [#allocation4], 1
    %17 = vsyncpa %s16, 0
    %18 = vsyncpa [#allocation10], 0
    %s19 = scalar_lea.sflag [#allocation10], 1
    %20 = vsyncpa %s19, 0
    loop: start=0, step=1, limit=4
    $region2: #{tpu_custom_call.1} parent=1 // loop_pre_header
      _
    $region3: #{tpu_custom_call.1} parent=1 // loop_header
      %s22 = sphi 0, %s26
      %p23 = scmp.ge.s32.totalorder %s22, 4
      %s29 = sphi 0, %s41
      %s30 = sphi 0, %s37
      %s31 = sphi 0, %s29
      %s32 = sphi 0, %s30
      %s33 = sphi 0, %s31
      %s34 = sphi 0, %s32
      %s46 = sphi 0, %s48
      %s49 = sphi 0, %s46
      %s50 = sphi 0, %s49
      %s66 = sphi 0, %s50
      %s70 = sphi 0, %s70
      %s72 = sphi 0, %s70
      %s73 = sphi 0, %s72
      %s87 = sphi 0, %s73
      %s95 = sphi 0, %s97
      %s98 = sphi 0, %s95
      %s99 = sphi 0, %s98
      %s115 = sphi 0, %s99
      %s123 = sphi 0, %s125
      %s126 = sphi 0, %s123
      %s127 = sphi 0, %s126
      %s143 = sphi 0, %s127
      %s151 = sphi 0, %s153
      %s154 = sphi 0, %s151
      %s155 = sphi 0, %s154
      %s171 = sphi 0, %s155
      %s179 = sphi 0, %s181
      %s182 = sphi 0, %s179
      %s183 = sphi 0, %s182
      %s199 = sphi 0, %s183
    $region4: #{tpu_custom_call.1} parent=1 // loop_header_branch
      %25 = sbr.rel (%p23) target = $region8
    $region5: #{tpu_custom_call.1} parent=1 // loop_body
      %s27 = ssub.s32 %s22, 1
      %s28 = ssub.s32 %s22, 2
      %s35 = sadd.s32 1, %s30
      %p36 = scmp.ge.s32.totalorder %s35, 1
      %s37 = scalar_select %p36, 0, %s35
      %s38 = sadd.s32 1, %s29
      %s39 = scalar_select %p36, %s38, %s29
      %p40 = scmp.ge.s32.totalorder %s39, 2
      %s41 = scalar_select %p40, 0, %s39
      %s42 = ssub.s32 %s29, %s41
      %s43 = ssub.s32 %s30, %s37
      %s44 = sor.u32 %s42, %s43
      %p45 = scmp.eq.s32.totalorder %s44, 0
      %s47 = sadd.s32 %s46, 1
      %s48 = scalar_select %p45, %s46, %s47
      %p51 = pneg %p45
      %p52 = scmp.eq.s32.totalorder %s22, 1
      %p53 = por %p51, %p52
      %p54 = scmp.ne.s32.totalorder %s46, %s49
      %p55 = scmp.eq.s32.totalorder %s22, 0
      %p56 = por %p54, %p55
      %p57 = scmp.ne.s32.totalorder %s46, %s49
      %p58 = scmp.eq.s32.totalorder %s27, 1
      %p59 = por %p57, %p58
      %p60 = scmp.ne.s32.totalorder %s49, %s50
      %p61 = scmp.eq.s32.totalorder %s27, 0
      %p62 = por %p60, %p61
      %p63 = scmp.ne.s32.totalorder %s49, %s50
      %p64 = scmp.eq.s32.totalorder %s28, 1
      %p65 = por %p63, %p64
      %p67 = scmp.ne.s32.totalorder %s50, %s66
      %p68 = scmp.eq.s32.totalorder %s28, 0
      %p69 = por %p67, %p68
      %s71 = sadd.s32 %s70, 1
      %p74 = scmp.eq.s32.totalorder %s22, 1
      %p75 = scmp.ne.s32.totalorder %s70, %s72
      %p76 = scmp.eq.s32.totalorder %s22, 0
      %p77 = por %p75, %p76
      %p78 = scmp.ne.s32.totalorder %s70, %s72
      %p79 = scmp.eq.s32.totalorder %s27, 1
      %p80 = por %p78, %p79
      %p81 = scmp.ne.s32.totalorder %s72, %s73
      %p82 = scmp.eq.s32.totalorder %s27, 0
      %p83 = por %p81, %p82
      %p84 = scmp.ne.s32.totalorder %s72, %s73
      %p85 = scmp.eq.s32.totalorder %s28, 1
      %p86 = por %p84, %p85
      %p88 = scmp.ne.s32.totalorder %s73, %s87
      %p89 = scmp.eq.s32.totalorder %s28, 0
      %p90 = por %p88, %p89
      %s91 = ssub.s32 %s29, %s41
      %s92 = ssub.s32 %s30, %s37
      %s93 = sor.u32 %s91, %s92
      %p94 = scmp.eq.s32.totalorder %s93, 0
      %s96 = sadd.s32 %s95, 1
      %s97 = scalar_select %p94, %s95, %s96
      %p100 = pneg %p94
      %p101 = scmp.eq.s32.totalorder %s22, 1
      %p102 = por %p100, %p101
      %p103 = scmp.ne.s32.totalorder %s95, %s98
      %p104 = scmp.eq.s32.totalorder %s22, 0
      %p105 = por %p103, %p104
      %p106 = scmp.ne.s32.totalorder %s95, %s98
      %p107 = scmp.eq.s32.totalorder %s27, 1
      %p108 = por %p106, %p107
      %p109 = scmp.ne.s32.totalorder %s98, %s99
      %p110 = scmp.eq.s32.totalorder %s27, 0
      %p111 = por %p109, %p110
      %p112 = scmp.ne.s32.totalorder %s98, %s99
      %p113 = scmp.eq.s32.totalorder %s28, 1
      %p114 = por %p112, %p113
      %p116 = scmp.ne.s32.totalorder %s99, %s115
      %p117 = scmp.eq.s32.totalorder %s28, 0
      %p118 = por %p116, %p117
      %s119 = ssub.s32 %s29, %s41
      %s120 = ssub.s32 %s30, %s37
      %s121 = sor.u32 %s119, %s120
      %p122 = scmp.eq.s32.totalorder %s121, 0
      %s124 = sadd.s32 %s123, 1
      %s125 = scalar_select %p122, %s123, %s124
      %p128 = pneg %p122
      %p129 = scmp.eq.s32.totalorder %s22, 1
      %p130 = por %p128, %p129
      %p131 = scmp.ne.s32.totalorder %s123, %s126
      %p132 = scmp.eq.s32.totalorder %s22, 0
      %p133 = por %p131, %p132
      %p134 = scmp.ne.s32.totalorder %s123, %s126
      %p135 = scmp.eq.s32.totalorder %s27, 1
      %p136 = por %p134, %p135
      %p137 = scmp.ne.s32.totalorder %s126, %s127
      %p138 = scmp.eq.s32.totalorder %s27, 0
      %p139 = por %p137, %p138
      %p140 = scmp.ne.s32.totalorder %s126, %s127
      %p141 = scmp.eq.s32.totalorder %s28, 1
      %p142 = por %p140, %p141
      %p144 = scmp.ne.s32.totalorder %s127, %s143
      %p145 = scmp.eq.s32.totalorder %s28, 0
      %p146 = por %p144, %p145
      %s147 = ssub.s32 %s29, %s41
      %s148 = ssub.s32 %s30, %s37
      %s149 = sor.u32 %s147, %s148
      %p150 = scmp.eq.s32.totalorder %s149, 0
      %s152 = sadd.s32 %s151, 1
      %s153 = scalar_select %p150, %s151, %s152
      %p156 = pneg %p150
      %p157 = scmp.eq.s32.totalorder %s22, 1
      %p158 = por %p156, %p157
      %p159 = scmp.ne.s32.totalorder %s151, %s154
      %p160 = scmp.eq.s32.totalorder %s22, 0
      %p161 = por %p159, %p160
      %p162 = scmp.ne.s32.totalorder %s151, %s154
      %p163 = scmp.eq.s32.totalorder %s27, 1
      %p164 = por %p162, %p163
      %p165 = scmp.ne.s32.totalorder %s154, %s155
      %p166 = scmp.eq.s32.totalorder %s27, 0
      %p167 = por %p165, %p166
      %p168 = scmp.ne.s32.totalorder %s154, %s155
      %p169 = scmp.eq.s32.totalorder %s28, 1
      %p170 = por %p168, %p169
      %p172 = scmp.ne.s32.totalorder %s155, %s171
      %p173 = scmp.eq.s32.totalorder %s28, 0
      %p174 = por %p172, %p173
      %s175 = ssub.s32 %s29, %s41
      %s176 = ssub.s32 %s30, %s37
      %s177 = sor.u32 %s175, %s176
      %p178 = scmp.eq.s32.totalorder %s177, 0
      %s180 = sadd.s32 %s179, 1
      %s181 = scalar_select %p178, %s179, %s180
      %p184 = pneg %p178
      %p185 = scmp.eq.s32.totalorder %s22, 1
      %p186 = por %p184, %p185
      %p187 = scmp.ne.s32.totalorder %s179, %s182
      %p188 = scmp.eq.s32.totalorder %s22, 0
      %p189 = por %p187, %p188
      %p190 = scmp.ne.s32.totalorder %s179, %s182
      %p191 = scmp.eq.s32.totalorder %s27, 1
      %p192 = por %p190, %p191
      %p193 = scmp.ne.s32.totalorder %s182, %s183
      %p194 = scmp.eq.s32.totalorder %s27, 0
      %p195 = por %p193, %p194
      %p196 = scmp.ne.s32.totalorder %s182, %s183
      %p197 = scmp.eq.s32.totalorder %s28, 1
      %p198 = por %p196, %p197
      %p200 = scmp.ne.s32.totalorder %s183, %s199
      %p201 = scmp.eq.s32.totalorder %s28, 0
      %p202 = por %p200, %p201
      %p203 = scmp.le.s32.totalorder 1, %s22
      %p204 = scmp.lt.s32.totalorder %s22, 3
      %p205 = pnand %p203, %p204
      %p206 = pneg %p205
      // Predicated region
      $region9: #{tpu_custom_call.1} parent=5 // pred_check
        _
      $region10: #{tpu_custom_call.1} parent=5 // pred_check_branch
        %208 = sbr.rel (%p205) target = $region12
      $region11: #{tpu_custom_call.1} parent=5 // pred_region
        %s209 = ssub.s32 %s22, 1
        // Predicated region
        $region13: #{tpu_custom_call.1} parent=11 // pred_check
          %p210 = pneg %p83
        $region14: #{tpu_custom_call.1} parent=11 // pred_check_branch
          %212 = sbr.rel (%p210) target = $region16
        $region15: #{tpu_custom_call.1} parent=11 // pred_region
          %s214 = ssub.s32 256, 256
          %215 = vsyncadd [#allocation6], %s214
          %s216 = sshll.u32 [#allocation5], 4
          %s217 = int_to_ptr.vmem [resolvable:$true] %s216
          %222 = dma.hbm_to_vmem [thread:$0]  %s1, 256, %s217, [#allocation6], 64, 64, 4
        $region16: #{tpu_custom_call.1} parent=11 // pred_fallthru
          _
      $region12: #{tpu_custom_call.1} parent=5 // pred_fallthru
        _
      %p223 = scmp.lt.s32.totalorder %s22, 2
      // Predicated region
      $region17: #{tpu_custom_call.1} parent=5 // pred_check
        %p224 = pneg %p223
      $region18: #{tpu_custom_call.1} parent=5 // pred_check_branch
        %226 = sbr.rel (%p224) target = $region20
      $region19: #{tpu_custom_call.1} parent=5 // pred_region
        // Predicated region
        $region21: #{tpu_custom_call.1} parent=19 // pred_check
          %p227 = pneg %p56
        $region22: #{tpu_custom_call.1} parent=19 // pred_check_branch
          %229 = sbr.rel (%p227) target = $region24
        $region23: #{tpu_custom_call.1} parent=19 // pred_region
          %s230 = sand.u32 %s22, 1
          %s231 = scalar_lea.sflag [#allocation3], %s230
          %s232 = sand.u32 %s46, 1
          %s233 = smul.addr %s232, 4
          %s234 = scalar_lea.vmem [#allocation2], %s233
          %s236 = ssub.s32 64, 64
          %237 = vsyncadd %s231, %s236
          %s238 = sadd.s32 %s30, %s29
          %s239 = smul.addr %s238, 64
          %s240 = scalar_lea.hbm %s0, %s239
          %s242 = sshll.u32 %s234, 4
          %s243 = int_to_ptr.vmem [resolvable:$true] %s242
          %245 = dma.hbm_to_vmem [thread:$0]  %s240, 64, %s243, %s231
        $region24: #{tpu_custom_call.1} parent=19 // pred_fallthru
          _
        // Predicated region
        $region25: #{tpu_custom_call.1} parent=19 // pred_check
          %p246 = pneg %p105
        $region26: #{tpu_custom_call.1} parent=19 // pred_check_branch
          %248 = sbr.rel (%p246) target = $region28
        $region27: #{tpu_custom_call.1} parent=19 // pred_region
          %s249 = sand.u32 %s22, 1
          %s250 = scalar_lea.sflag [#allocation3], %s249
          %s251 = sand.u32 %s95, 1
          %s252 = smul.addr %s251, 8
          %s253 = scalar_lea.vmem [#allocation7], %s252
          %s255 = ssub.s32 128, 128
          %256 = vsyncadd %s250, %s255
          %s257 = sadd.s32 %s30, %s29
          %s258 = smul.addr %s257, 128
          %s259 = scalar_lea.hbm %s2, %s258
          %s261 = sshll.u32 %s253, 4
          %s262 = int_to_ptr.vmem [resolvable:$true] %s261
          %264 = dma.hbm_to_vmem [thread:$0]  %s259, 128, %s262, %s250
        $region28: #{tpu_custom_call.1} parent=19 // pred_fallthru
          _
      $region20: #{tpu_custom_call.1} parent=5 // pred_fallthru
        _
      %p265 = scmp.le.s32.totalorder 1, %s22
      %p266 = scmp.lt.s32.totalorder %s22, 3
      %p267 = pnand %p265, %p266
      %p268 = pneg %p267
      // Predicated region
      $region29: #{tpu_custom_call.1} parent=5 // pred_check
        _
      $region30: #{tpu_custom_call.1} parent=5 // pred_check_branch
        %270 = sbr.rel (%p267) target = $region32
      $region31: #{tpu_custom_call.1} parent=5 // pred_region
        %s271 = ssub.s32 %s22, 1
        %s272 = sand.u32 %s27, 1
        %s273 = scalar_lea.sflag [#allocation3], %s272
        %s274 = sand.u32 %s49, 1
        %s275 = smul.addr %s274, 4
        %s276 = scalar_lea.vmem [#allocation2], %s275
        // Predicated region
        $region33: #{tpu_custom_call.1} parent=31 // pred_check
          %p277 = pneg %p62
        $region34: #{tpu_custom_call.1} parent=31 // pred_check_branch
          %279 = sbr.rel (%p277) target = $region36
        $region35: #{tpu_custom_call.1} parent=31 // pred_region
          %280 = dma.done %s273, 64
        $region36: #{tpu_custom_call.1} parent=31 // pred_fallthru
          _
        // Predicated region
        $region37: #{tpu_custom_call.1} parent=31 // pred_check
          %p281 = pneg %p83
        $region38: #{tpu_custom_call.1} parent=31 // pred_check_branch
          %283 = sbr.rel (%p281) target = $region40
        $region39: #{tpu_custom_call.1} parent=31 // pred_region
          %284 = dma.done [#allocation6], 256
        $region40: #{tpu_custom_call.1} parent=31 // pred_fallthru
          _
        %s285 = sand.u32 %s27, 1
        %s286 = scalar_lea.sflag [#allocation3], %s285
        %s287 = sand.u32 %s98, 1
        %s288 = smul.addr %s287, 8
        %s289 = scalar_lea.vmem [#allocation7], %s288
        // Predicated region
        $region41: #{tpu_custom_call.1} parent=31 // pred_check
          %p290 = pneg %p111
        $region42: #{tpu_custom_call.1} parent=31 // pred_check_branch
          %292 = sbr.rel (%p290) target = $region44
        $region43: #{tpu_custom_call.1} parent=31 // pred_region
          %293 = dma.done %s286, 128
        $region44: #{tpu_custom_call.1} parent=31 // pred_fallthru
          _
        %s294 = sand.u32 %s27, 1
        %s295 = scalar_lea.sflag [#allocation3], %s294
        %s296 = sand.u32 %s49, 1
        %s297 = smul.addr %s296, 4
        %s298 = scalar_lea.vmem [#allocation2], %s297
        %p299 = pneg %p62
        %p300 = pneg %p59
        %p301 = pneg %p83
        %p302 = pneg %p80
        %s303 = sand.u32 %s27, 1
        %s304 = scalar_lea.sflag [#allocation3], %s303
        %s305 = sand.u32 %s98, 1
        %s306 = smul.addr %s305, 8
        %s307 = scalar_lea.vmem [#allocation7], %s306
        %p308 = pneg %p111
        %p309 = pneg %p108
        %p310 = pneg %p139
        %p311 = pneg %p136
        %s312 = sand.u32 %s126, 1
        %s313 = scalar_lea.sflag [#allocation4], %s312
        %s314 = sand.u32 %s126, 1
        %s315 = smul.addr %s314, 4
        %s316 = scalar_lea.vmem [#allocation8], %s315
        %p317 = pneg %p167
        %p318 = pneg %p164
        %s319 = sand.u32 %s27, 1
        %s320 = scalar_lea.sflag [#allocation10], %s319
        %s321 = sand.u32 %s154, 1
        %s322 = smul.addr %s321, 4
        %s323 = scalar_lea.vmem [#allocation9], %s322
        %p324 = pneg %p195
        %p325 = pneg %p192
        %s326 = sand.u32 %s27, 1
        %s327 = scalar_lea.sflag [#allocation10], %s326
        %s328 = sand.u32 %s182, 1
        %s329 = smul.addr %s328, 4
        %s330 = scalar_lea.vmem [#allocation11], %s329
        %v332 = vld [vmem:[%s276] sm:$0xf]
        %v333 = vld [vmem:[#allocation5] sm:$0xf]
        %v334 = vld [vmem:[#allocation5 + $0x4] sm:$0xf]
        %v335 = vld [vmem:[#allocation5 + $0x8] sm:$0xf]
        %v336 = vld [vmem:[#allocation5 + $0xc] sm:$0xf]
        %v337 = vld [vmem:[%s289] sm:$0xff]
        %v342 = vunpack.c.l.b16 %v333
        %v343 = vunpack.c.l.b16 %v334
        %v344 = vunpack.c.l.b16 %v335
        %v345 = vunpack.c.l.b16 %v336
        %v346 = vpack.c.b16 %v343, %v342
        %v347 = vpack.c.b16 %v345, %v344
        %vm350 = vcmask 261120
        %v352 = vsel %vm350, %v332, 0
        %354 = vmatprep.subr.bf16.mxu0 0
        %355 = vmatpush1.bf16.msra.mxu0 %v346
        %356 = vmatprep.subr.bf16.mxu0 0
        %357 = vmatpush1.bf16.msra.mxu0 %v347
        %358 = vmatprep.subr.bf16.mxu0 0
        %359 = vmatpush1.bf16.msra.mxu0 0
        %360 = vmatprep.subr.bf16.mxu0 0
        %361 = vmatpush1.bf16.msra.mxu0 0
        %362 = vmatprep.subr.bf16.mxu0 0
        %363 = vmatpush1.bf16.msra.mxu0 0
        %364 = vmatprep.subr.bf16.mxu0 0
        %365 = vmatpush1.bf16.msra.mxu0 0
        %366 = vmatprep.subr.bf16.mxu0 0
        %367 = vmatpush1.bf16.msra.mxu0 0
        %368 = vmatprep.subr.bf16.mxu0 0
        %369 = vmatpush1.bf16.msra.mxu0 0
        %370 = vmatprep.subr.bf16.mxu0 0
        %371 = vmatpush1.bf16.msra.mxu0 0
        %372 = vmatprep.subr.bf16.mxu0 0
        %373 = vmatpush1.bf16.msra.mxu0 0
        %374 = vmatprep.subr.bf16.mxu0 0
        %375 = vmatpush1.bf16.msra.mxu0 0
        %376 = vmatprep.subr.bf16.mxu0 0
        %377 = vmatpush1.bf16.msra.mxu0 0
        %378 = vmatprep.subr.bf16.mxu0 0
        %379 = vmatpush1.bf16.msra.mxu0 0
        %380 = vmatprep.subr.bf16.mxu0 0
        %381 = vmatpush1.bf16.msra.mxu0 0
        %382 = vmatprep.subr.bf16.mxu0 0
        %383 = vmatpush1.bf16.msra.mxu0 0
        %384 = vmatprep.subr.bf16.mxu0 0
        %385 = vmatpush1.bf16.msra.mxu0 0
        %386 = vmatprep.mubr.bf16.mxu0 0
        %387 = vmatmul.mubr.bf16.gmra.mrb[0].mxu0 %v352
        %v388 = vpop.f32.mrb[0].mxu0
        %v389 = vadd.f32 0.0, %v388
        %v390 = vpop.f32.mrb[0].mxu0
        %v391 = vpop.f32.mrb[0].mxu0
        %v392 = vpop.f32.mrb[0].mxu0
        %393 = vdwg.mxu0
        %v394 = vmul.f32 %v389, %v337
        %396 = vrot.lane.b32.xlu0 %v394, 124
        %v397 = vpop.permute.xlu0 %396
        %v399 = vsub.f32 %v394, %v397
        %401 = vrot.lane.b32.xlu0 %v337, 124
        %v402 = vpop.permute.xlu0 %401
        %v404 = vmul.f32 %v389, %v402
        %405 = vrot.lane.b32.xlu0 %v337, 4
        %v406 = vpop.permute.xlu0 %405
        %v408 = vmul.f32 %v389, %v406
        %410 = vrot.lane.b32.xlu0 %v408, 124
        %v411 = vpop.permute.xlu0 %410
        %v413 = vadd.f32 %v404, %v411
        %414 = vrot.lane.b32.xlu0 %v337, 8
        %v415 = vpop.permute.xlu0 %414
        %v417 = vmul.f32 %v389, %v415
        %419 = vrot.lane.b32.xlu0 %v417, 124
        %v420 = vpop.permute.xlu0 %419
        %v422 = vsub.f32 %v417, %v420
        %423 = vrot.lane.b32.xlu0 %v337, 12
        %v424 = vpop.permute.xlu0 %423
        %v426 = vmul.f32 %v389, %v424
        %428 = vrot.lane.b32.xlu0 %v426, 124
        %v429 = vpop.permute.xlu0 %428
        %v431 = vadd.f32 %v408, %v429
        %432 = vrot.lane.b32.xlu0 %v337, 16
        %v433 = vpop.permute.xlu0 %432
        %v435 = vmul.f32 %v389, %v433
        %437 = vrot.lane.b32.xlu0 %v435, 124
        %v438 = vpop.permute.xlu0 %437
        %v440 = vsub.f32 %v435, %v438
        %441 = vrot.lane.b32.xlu0 %v337, 20
        %v442 = vpop.permute.xlu0 %441
        %v444 = vmul.f32 %v389, %v442
        %446 = vrot.lane.b32.xlu0 %v444, 124
        %v447 = vpop.permute.xlu0 %446
        %v449 = vadd.f32 %v426, %v447
        %450 = vrot.lane.b32.xlu0 %v337, 24
        %v451 = vpop.permute.xlu0 %450
        %v453 = vmul.f32 %v389, %v451
        %455 = vrot.lane.b32.xlu0 %v453, 124
        %v456 = vpop.permute.xlu0 %455
        %v458 = vsub.f32 %v453, %v456
        %459 = vrot.lane.b32.xlu0 %v337, 28
        %v460 = vpop.permute.xlu0 %459
        %v462 = vmul.f32 %v389, %v460
        %464 = vrot.lane.b32.xlu0 %v462, 124
        %v465 = vpop.permute.xlu0 %464
        %v467 = vadd.f32 %v444, %v465
        %469 = vrot.lane.b32.xlu0 %v413, 4
        %v470 = vpop.permute.xlu0 %469
        %473 = vrot.lane.b32.xlu0 %v431, 4
        %v474 = vpop.permute.xlu0 %473
        %477 = vrot.lane.b32.xlu0 %v449, 4
        %v478 = vpop.permute.xlu0 %477
        %481 = vrot.lane.b32.xlu0 %v467, 4
        %v482 = vpop.permute.xlu0 %481
        %vm484 = vcmask 31744
        %v485 = vsel %vm484, %v399, %v470
        %vm486 = vcmask 64512
        %v487 = vsel %vm486, %v485, %v422
        %vm488 = vcmask 97280
        %v489 = vsel %vm488, %v487, %v474
        %vm490 = vcmask 130048
        %v491 = vsel %vm490, %v489, %v440
        %vm492 = vcmask 162816
        %v493 = vsel %vm492, %v491, %v478
        %vm494 = vcmask 195584
        %v495 = vsel %vm494, %v493, %v458
        %vm496 = vcmask 228352
        %v497 = vsel %vm496, %v495, %v482
        %v498 = vpack.c.bf16 %v497, %v497
        %vm499 = vcmask 257024
        %500 = vst.msk [vmem:[%s316] sm:$0xf] %vm499, %v498
        %501 = vrot.lane.b32.xlu0 %v337, 32
        %v502 = vpop.permute.xlu0 %501
        %v504 = vmul.f32 %v389, %v502
        %506 = vrot.lane.b32.xlu0 %v504, 124
        %v507 = vpop.permute.xlu0 %506
        %v509 = vsub.f32 %v504, %v507
        %510 = vrot.lane.b32.xlu0 %v337, 36
        %v511 = vpop.permute.xlu0 %510
        %v513 = vmul.f32 %v389, %v511
        %515 = vrot.lane.b32.xlu0 %v513, 124
        %v516 = vpop.permute.xlu0 %515
        %v518 = vadd.f32 %v462, %v516
        %519 = vrot.lane.b32.xlu0 %v337, 40
        %v520 = vpop.permute.xlu0 %519
        %v522 = vmul.f32 %v389, %v520
        %524 = vrot.lane.b32.xlu0 %v522, 124
        %v525 = vpop.permute.xlu0 %524
        %v527 = vsub.f32 %v522, %v525
        %528 = vrot.lane.b32.xlu0 %v337, 44
        %v529 = vpop.permute.xlu0 %528
        %v531 = vmul.f32 %v389, %v529
        %533 = vrot.lane.b32.xlu0 %v531, 124
        %v534 = vpop.permute.xlu0 %533
        %v536 = vadd.f32 %v513, %v534
        %537 = vrot.lane.b32.xlu0 %v337, 48
        %v538 = vpop.permute.xlu0 %537
        %v540 = vmul.f32 %v389, %v538
        %542 = vrot.lane.b32.xlu0 %v540, 124
        %v543 = vpop.permute.xlu0 %542
        %v545 = vsub.f32 %v540, %v543
        %546 = vrot.lane.b32.xlu0 %v337, 52
        %v547 = vpop.permute.xlu0 %546
        %v549 = vmul.f32 %v389, %v547
        %551 = vrot.lane.b32.xlu0 %v549, 124
        %v552 = vpop.permute.xlu0 %551
        %v554 = vadd.f32 %v531, %v552
        %555 = vrot.lane.b32.xlu0 %v337, 56
        %v556 = vpop.permute.xlu0 %555
        %v558 = vmul.f32 %v389, %v556
        %560 = vrot.lane.b32.xlu0 %v558, 124
        %v561 = vpop.permute.xlu0 %560
        %v563 = vsub.f32 %v558, %v561
        %564 = vrot.lane.b32.xlu0 %v337, 60
        %v565 = vpop.permute.xlu0 %564
        %v567 = vmul.f32 %v389, %v565
        %569 = vrot.lane.b32.xlu0 %v567, 124
        %v570 = vpop.permute.xlu0 %569
        %v572 = vadd.f32 %v549, %v570
        %574 = vrot.lane.b32.xlu0 %v509, 96
        %v575 = vpop.permute.xlu0 %574
        %578 = vrot.lane.b32.xlu0 %v518, 100
        %v579 = vpop.permute.xlu0 %578
        %582 = vrot.lane.b32.xlu0 %v527, 96
        %v583 = vpop.permute.xlu0 %582
        %586 = vrot.lane.b32.xlu0 %v536, 100
        %v587 = vpop.permute.xlu0 %586
        %590 = vrot.lane.b32.xlu0 %v545, 96
        %v591 = vpop.permute.xlu0 %590
        %594 = vrot.lane.b32.xlu0 %v554, 100
        %v595 = vpop.permute.xlu0 %594
        %598 = vrot.lane.b32.xlu0 %v563, 96
        %v599 = vpop.permute.xlu0 %598
        %602 = vrot.lane.b32.xlu0 %v572, 100
        %v603 = vpop.permute.xlu0 %602
        %v605 = vsel %vm484, %v575, %v579
        %v606 = vsel %vm486, %v605, %v583
        %v607 = vsel %vm488, %v606, %v587
        %v608 = vsel %vm490, %v607, %v591
        %v609 = vsel %vm492, %v608, %v595
        %v610 = vsel %vm494, %v609, %v599
        %v611 = vsel %vm496, %v610, %v603
        %v612 = vpack.c.bf16 %v611, %v611
        %613 = vst.msk [vmem:[%s323] sm:$0xf] %vm499, %v612
        %v614 = vpack.c.bf16 %v389, %v389
        %v616 = vunpack.c.l.b16 %v614
        %v617 = vpack.c.b16 %v616, %v616
        %618 = vrot.lane.b32.xlu0 %v617, 64
        %v619 = vpop.permute.xlu0 %618
        %621 = vst.msk [vmem:[%s330] sm:$0xf] %vm499, %v619
        %s622 = sand.u32 %s126, 1
        %s623 = scalar_lea.sflag [#allocation4], %s622
        %s624 = sand.u32 %s126, 1
        %s625 = smul.addr %s624, 4
        %s626 = scalar_lea.vmem [#allocation8], %s625
        %s627 = sand.u32 %s27, 1
        %s628 = scalar_lea.sflag [#allocation10], %s627
        %s629 = sand.u32 %s154, 1
        %s630 = smul.addr %s629, 4
        %s631 = scalar_lea.vmem [#allocation9], %s630
        %s632 = sand.u32 %s27, 1
        %s633 = scalar_lea.sflag [#allocation10], %s632
        %s634 = sand.u32 %s182, 1
        %s635 = smul.addr %s634, 4
        %s636 = scalar_lea.vmem [#allocation11], %s635
        // Predicated region
        $region45: #{tpu_custom_call.1} parent=31 // pred_check
          %p637 = pneg %p136
        $region46: #{tpu_custom_call.1} parent=31 // pred_check_branch
          %639 = sbr.rel (%p637) target = $region48
        $region47: #{tpu_custom_call.1} parent=31 // pred_region
          %s641 = ssub.s32 64, 64
          %642 = vsyncadd %s623, %s641
          %s643 = sadd.s32 %s32, %s31
          %s644 = smul.addr %s643, 64
          %s645 = scalar_lea.hbm %s3, %s644
          %s647 = sshll.u32 %s626, 4
          %s648 = int_to_ptr.vmem [resolvable:$true] %s647
          %650 = dma.vmem_to_hbm [thread:$0]  %s648, 64, %s645, %s623
        $region48: #{tpu_custom_call.1} parent=31 // pred_fallthru
          _
        // Predicated region
        $region49: #{tpu_custom_call.1} parent=31 // pred_check
          %p651 = pneg %p164
        $region50: #{tpu_custom_call.1} parent=31 // pred_check_branch
          %653 = sbr.rel (%p651) target = $region52
        $region51: #{tpu_custom_call.1} parent=31 // pred_region
          %s655 = ssub.s32 64, 64
          %656 = vsyncadd %s628, %s655
          %s657 = sadd.s32 %s32, %s31
          %s658 = smul.addr %s657, 64
          %s659 = scalar_lea.hbm %s4, %s658
          %s661 = sshll.u32 %s631, 4
          %s662 = int_to_ptr.vmem [resolvable:$true] %s661
          %664 = dma.vmem_to_hbm [thread:$0]  %s662, 64, %s659, %s628
        $region52: #{tpu_custom_call.1} parent=31 // pred_fallthru
          _
        // Predicated region
        $region53: #{tpu_custom_call.1} parent=31 // pred_check
          %p665 = pneg %p192
        $region54: #{tpu_custom_call.1} parent=31 // pred_check_branch
          %667 = sbr.rel (%p665) target = $region56
        $region55: #{tpu_custom_call.1} parent=31 // pred_region
          %s669 = ssub.s32 64, 64
          %670 = vsyncadd %s633, %s669
          %s671 = sadd.s32 %s32, %s31
          %s672 = smul.addr %s671, 64
          %s673 = scalar_lea.hbm %s5, %s672
          %s675 = sshll.u32 %s636, 4
          %s676 = int_to_ptr.vmem [resolvable:$true] %s675
          %678 = dma.vmem_to_hbm [thread:$0]  %s676, 64, %s673, %s633
        $region56: #{tpu_custom_call.1} parent=31 // pred_fallthru
          _
      $region32: #{tpu_custom_call.1} parent=5 // pred_fallthru
        _
      %p679 = scmp.le.s32.totalorder 2, %s22
      // Predicated region
      $region57: #{tpu_custom_call.1} parent=5 // pred_check
        %p680 = pneg %p679
      $region58: #{tpu_custom_call.1} parent=5 // pred_check_branch
        %682 = sbr.rel (%p680) target = $region60
      $region59: #{tpu_custom_call.1} parent=5 // pred_region
        %s683 = ssub.s32 %s22, 2
        // Predicated region
        $region61: #{tpu_custom_call.1} parent=59 // pred_check
          %p684 = pneg %p142
        $region62: #{tpu_custom_call.1} parent=59 // pred_check_branch
          %686 = sbr.rel (%p684) target = $region64
        $region63: #{tpu_custom_call.1} parent=59 // pred_region
          %s687 = sand.u32 %s127, 1
          %s688 = scalar_lea.sflag [#allocation4], %s687
          %s689 = sand.u32 %s127, 1
          %s690 = smul.addr %s689, 4
          %s691 = scalar_lea.vmem [#allocation8], %s690
          %692 = dma.done %s688, 64
        $region64: #{tpu_custom_call.1} parent=59 // pred_fallthru
          _
        // Predicated region
        $region65: #{tpu_custom_call.1} parent=59 // pred_check
          %p693 = pneg %p170
        $region66: #{tpu_custom_call.1} parent=59 // pred_check_branch
          %695 = sbr.rel (%p693) target = $region68
        $region67: #{tpu_custom_call.1} parent=59 // pred_region
          %s696 = sand.u32 %s28, 1
          %s697 = scalar_lea.sflag [#allocation10], %s696
          %s698 = sand.u32 %s155, 1
          %s699 = smul.addr %s698, 4
          %s700 = scalar_lea.vmem [#allocation9], %s699
          %701 = dma.done %s697, 64
        $region68: #{tpu_custom_call.1} parent=59 // pred_fallthru
          _
        // Predicated region
        $region69: #{tpu_custom_call.1} parent=59 // pred_check
          %p702 = pneg %p198
        $region70: #{tpu_custom_call.1} parent=59 // pred_check_branch
          %704 = sbr.rel (%p702) target = $region72
        $region71: #{tpu_custom_call.1} parent=59 // pred_region
          %s705 = sand.u32 %s28, 1
          %s706 = scalar_lea.sflag [#allocation10], %s705
          %s707 = sand.u32 %s183, 1
          %s708 = smul.addr %s707, 4
          %s709 = scalar_lea.vmem [#allocation11], %s708
          %710 = dma.done %s706, 64
        $region72: #{tpu_custom_call.1} parent=59 // pred_fallthru
          _
      $region60: #{tpu_custom_call.1} parent=5 // pred_fallthru
        _
    $region6: #{tpu_custom_call.1} parent=1 // loop_footer
      %s26 = sadd.s32 1, %s22
    $region7: #{tpu_custom_call.1} parent=1 // loop_footer_branch
      %21 = sbr.rel target = $region3
    $region8: #{tpu_custom_call.1} parent=1 // loop_exit
      _
    %711 = vsyncpa [#allocation3], 1
    %s712 = scalar_lea.sflag [#allocation3], 1
    %713 = vsyncpa %s712, 1
    %714 = vsyncpa [#allocation6], 1
    %715 = vsyncpa [#allocation4], 1
    %s716 = scalar_lea.sflag [#allocation4], 1
    %717 = vsyncpa %s716, 1
    %718 = vsyncpa [#allocation10], 1
    %s719 = scalar_lea.sflag [#allocation10], 1
    %720 = vsyncpa %s719, 1

</llo_original>
